<compile_context>
chip_gen: v6e
topology: v6e:2x2x1
jax: 0.10.0
libtpu: 0.0.40
codegen_flags: <defaults>
</compile_context>

<pallas_src>
import jax
import jax.numpy as jnp
from jax import lax
from jax.experimental import pallas as pl
from jax.experimental.pallas import tpu as pltpu

# ---- deterministic hyperparameters (mirror BaseModel(..., s=30.0, m=0.7, h=0.5)) ----
S = 30.0            # AdaFace scale
M = 0.7             # AdaFace margin
H_PARAM = 0.5       # AdaFace h
ADA_EPS = 1e-6
T_ALPHA = 0.01
GEM_P = 3.0         # TODO(synk): GeM p is a learnable scalar in PyTorch; fixed at its init value 3.0 here.
GEM_EPS = 1e-6
BN_EPS = 1e-5       # nn.BatchNorm1d default eps

_VMEM_LIMIT = 48 * 1024 * 1024   # fits v7x's 64 MiB physical VMEM; plenty on v5e/v6e.


# ---------------------------------------------------------------------------
# Kernel 1: fused stem (1x1 conv == channel matmul) + GeM pooling
# ---------------------------------------------------------------------------
def _pick_hw_tile(hw, feat_dim):
    """Largest spatial tile (multiple of 128 dividing hw, or hw itself) whose (F, THW)
    f32 intermediate stays ~4 MiB, so double-buffered inputs + temporaries fit VMEM."""
    budget_elems = (4 * 1024 * 1024) // (4 * max(feat_dim, 1))
    cap = max(128, (budget_elems // 128) * 128)
    if hw <= cap:
        return hw
    for t in range(cap, 0, -128):
        if hw % t == 0:
            return t
    return hw


def _make_stem_gem_kernel(hw):
    inv_hw = 1.0 / float(hw)

    def kernel(x_ref, w_ref, b_ref, o_ref, acc_ref):
        t = pl.program_id(1)

        @pl.when(t == 0)
        def _init():
            acc_ref[...] = jnp.zeros_like(acc_ref)

        # stem: 1x1 conv == pointwise channel matmul, standard (F,C) @ (C,THW) contraction.
        x = x_ref[0]                                                        # (C, THW)
        feat = jnp.dot(w_ref[...], x, preferred_element_type=jnp.float32)   # (F, THW)
        feat = jnp.maximum(feat + b_ref[...], GEM_EPS)                      # clamp(min=eps)
        # GeM with p = 3: x**p is two VPU multiplies (no per-element exp/log).
        acc_ref[...] += jnp.sum(feat * feat * feat, axis=1, keepdims=True)  # (F, 1)

        @pl.when(t == pl.num_programs(1) - 1)
        def _finish():
            m = acc_ref[...] * inv_hw                                       # spatial mean
            o_ref[0] = jnp.exp(jnp.log(m) * (1.0 / GEM_P))                  # m ** (1/p), m > 0

    return kernel


def stem_gem_pool(x_bc_hw, w_stem, b_stem):
    """Fused stand-in backbone (1x1-conv stem) + GeM pooling.

    x_bc_hw: (B, C, HW) float32; w_stem: (F, C); b_stem: (F,).  Returns (B, F).
    """
    # TODO(synk): the timm `create_model(..., features_only=True)` backbone has no clean
    # Pallas equivalent; a single 1x1-conv stem stands in for its final feature map.
    B, C, HW = x_bc_hw.shape
    F = w_stem.shape[0]
    thw = _pick_hw_tile(HW, F)
    grid = (B, HW // thw)

    out = pl.pallas_call(
        _make_stem_gem_kernel(HW),
        grid_spec=pltpu.PrefetchScalarGridSpec(
            num_scalar_prefetch=0,
            grid=grid,
            in_specs=[
                pl.BlockSpec((1, C, thw), lambda b, t: (b, 0, t)),
                pl.BlockSpec((F, C), lambda b, t: (0, 0)),
                pl.BlockSpec((F, 1), lambda b, t: (0, 0)),
            ],
            out_specs=pl.BlockSpec((1, F, 1), lambda b, t: (b, 0, 0)),
            scratch_shapes=[pltpu.VMEM((F, 1), jnp.float32)],
        ),
        out_shape=jax.ShapeDtypeStruct((B, F, 1), jnp.float32),
        compiler_params=pltpu.CompilerParams(
            dimension_semantics=("parallel", "arbitrary"),
            vmem_limit_bytes=_VMEM_LIMIT,
        ),
        cost_estimate=pl.CostEstimate(
            flops=int(2 * B * HW * C * F + 4 * B * HW * F),
            transcendentals=int(2 * B * F),
            bytes_accessed=int(4 * (B * C * HW + F * C + F + B * F)),
        ),
    )(x_bc_hw, w_stem, b_stem.reshape(F, 1))
    return out.reshape(B, F)


# ---------------------------------------------------------------------------
# Kernel 2: fused neck (Linear -> BN(eval) -> GELU -> Dropout(eval)) + AdaFace decoder,
#           tiled over lane-dense class columns.
# ---------------------------------------------------------------------------
def _neck_decoder_kernel(pooled_ref, wneck_ref, bneck_ref, gamma_ref, beta_ref,
                         rmean_ref, rvar_ref, buf_ref, label_ref, wdec_ref,
                         o_ref, stats_ref, z_sc, margin_sc):
    j = pl.program_id(0)
    nb = pooled_ref.shape[0]
    tnc = o_ref.shape[1]

    # ---- once per forward: neck, feature norm, batch-stat EMA, per-sample margin ----
    @pl.when(j == 0)
    def _prologue():
        # neck: Linear -> BatchNorm1d (eval-mode running stats) -> exact GELU -> Dropout=id
        y = (jnp.dot(pooled_ref[...], wneck_ref[...],
                     preferred_element_type=jnp.float32) + bneck_ref[...])
        y = ((y - rmean_ref[...]) * lax.rsqrt(rvar_ref[...] + BN_EPS)
             * gamma_ref[...] + beta_ref[...])
        y = 0.5 * y * (1.0 + lax.erf(y * 0.7071067811865476))

        norm = jnp.maximum(jnp.sqrt(jnp.sum(y * y, axis=1, keepdims=True)), ADA_EPS)  # (B,1)
        z_sc[...] = y / norm                                            # input_normalized

        # EMA update of batch_mean / batch_std (torch .std() is unbiased, ddof=1).
        bmean = jnp.mean(norm, axis=0, keepdims=True)                   # (1,1)
        diff = norm - bmean
        denom = float(max(nb - 1, 1))     # torch yields NaN at B==1; guard instead
        bstd = jnp.sqrt(jnp.sum(diff * diff, axis=0, keepdims=True) / denom)
        new_mean = (1.0 - T_ALPHA) * buf_ref[:, 0:1] + T_ALPHA * bmean
        new_std = (1.0 - T_ALPHA) * buf_ref[:, 1:2] + T_ALPHA * bstd
        stats_ref[:, 0:1] = new_mean                                    # persisted buffers
        stats_ref[:, 1:2] = new_std

        margin_sc[...] = M + H_PARAM * (norm - new_mean) / (new_std + ADA_EPS)  # (B,1)

    # ---- per class tile: normalized-weight cosine + AdaFace margin blend ----
    w = wdec_ref[...]                                                   # (TNC, E)
    # F.normalize: w / max(||w||, 1e-12) == w * rsqrt(max(||w||^2, 1e-24)) (EUP rsqrt)
    inv_wn = lax.rsqrt(jnp.maximum(jnp.sum(w * w, axis=1, keepdims=True), 1e-24))
    cosine = lax.dot_general(z_sc[...], w * inv_wn, (((1,), (1,)), ((), ())),
                             preferred_element_type=jnp.float32)        # (B, TNC)
    cosine = jnp.clip(cosine, -1.0 + ADA_EPS, 1.0 - ADA_EPS)

    # one-hot restricted to this class tile; label -1 (the `label is None` branch)
    # selects nothing, so that row's output is exactly cosine * s.
    cls = lax.broadcasted_iota(jnp.int32, (nb, tnc), 1) + j * tnc
    one_hot = (cls == label_ref[...]).astype(jnp.float32)

    m_ps = margin_sc[...]                                               # (B, 1)
    # cos(acos(c) + m) = c*cos(m) - sqrt(1 - c^2)*sin(m)   (acos in [0, pi] => sin >= 0)
    sin_t = jnp.sqrt(jnp.maximum(1.0 - cosine * cosine, 0.0))
    target = cosine * jnp.cos(m_ps) - sin_t * jnp.sin(m_ps)
    o_ref[...] = (cosine * (1.0 - one_hot) + target * one_hot) * S


def _pick_class_tile(nc_pad):
    for t in (1024, 512, 256, 128):
        if nc_pad % t == 0:
            return t
    return nc_pad


def neck_decoder(pooled, params, labels):
    B, F = pooled.shape
    E = params["w_neck"].shape[1]
    NC = params["w_dec"].shape[0]
    nc_pad = ((NC + 127) // 128) * 128          # lane-dense logits stores
    tnc = _pick_class_tile(nc_pad)
    w_dec = params["w_dec"]
    if nc_pad != NC:
        # zero rows normalize to zero -> zero logits in the padded columns (sliced off).
        w_dec = jnp.pad(w_dec, ((0, nc_pad - NC), (0, 0)))

    args = (
        pooled,
        params["w_neck"],
        params["b_neck"].reshape(1, E),
        params["bn_gamma"].reshape(1, E),
        params["bn_beta"].reshape(1, E),
        params["bn_mean"].reshape(1, E),
        params["bn_var"].reshape(1, E),
        params["ada_buffers"].reshape(1, 2),
        labels.astype(jnp.int32).reshape(B, 1),
        w_dec,
    )
    in_specs = [
        pl.BlockSpec((B, F), lambda j: (0, 0)),
        pl.BlockSpec((F, E), lambda j: (0, 0)),
        pl.BlockSpec((1, E), lambda j: (0, 0)),
        pl.BlockSpec((1, E), lambda j: (0, 0)),
        pl.BlockSpec((1, E), lambda j: (0, 0)),
        pl.BlockSpec((1, E), lambda j: (0, 0)),
        pl.BlockSpec((1, E), lambda j: (0, 0)),
        pl.BlockSpec((1, 2), lambda j: (0, 0)),
        pl.BlockSpec((B, 1), lambda j: (0, 0)),
        pl.BlockSpec((tnc, E), lambda j: (j, 0)),
    ]
    out_specs = (
        pl.BlockSpec((B, tnc), lambda j: (0, j)),
        pl.BlockSpec((1, 2), lambda j: (0, 0)),
    )
    out_shape = (
        jax.ShapeDtypeStruct((B, nc_pad), jnp.float32),
        jax.ShapeDtypeStruct((1, 2), jnp.float32),
    )
    logits, new_buffers = pl.pallas_call(
        _neck_decoder_kernel,
        grid_spec=pltpu.PrefetchScalarGridSpec(
            num_scalar_prefetch=0,
            grid=(nc_pad // tnc,),
            in_specs=in_specs,
            out_specs=out_specs,
            scratch_shapes=[pltpu.VMEM((B, E), jnp.float32),
                            pltpu.VMEM((B, 1), jnp.float32)],
        ),
        out_shape=out_shape,
        compiler_params=pltpu.CompilerParams(
            dimension_semantics=("arbitrary",),
            vmem_limit_bytes=_VMEM_LIMIT,
        ),
        cost_estimate=pl.CostEstimate(
            flops=int(2 * B * F * E + 3 * nc_pad * E + 2 * B * E * nc_pad + 10 * B * nc_pad),
            transcendentals=int(2 * B * E + nc_pad + 8 * B),
            bytes_accessed=int(4 * (B * F + F * E + 6 * E + B + nc_pad * E + B * nc_pad + 4)),
        ),
    )(*args)
    return logits[:, :NC], new_buffers


# ---------------------------------------------------------------------------
# Full BaseModel forward
# ---------------------------------------------------------------------------
def base_model_forward(x_nchw, labels, params):
    """Returns (logits (B, num_classes), updated (1, 2) [batch_mean, batch_std] buffers)."""
    B, C, Himg, Wimg = x_nchw.shape
    x = x_nchw.reshape(B, C, Himg * Wimg)        # free reshape; no NCHW->NHWC transpose pass
    pooled = stem_gem_pool(x, params["w_stem"], params["b_stem"])       # (B, F)
    if labels is None:
        labels = jnp.full((B,), -1, dtype=jnp.int32)
    return neck_decoder(pooled, params, labels)


def init_params(key, c_in, feat_dim, embedding, num_classes):
    k1, k2, k3, k4 = jax.random.split(key, 4)
    bound_neck = 1.0 / jnp.sqrt(feat_dim)
    a_xavier = jnp.sqrt(6.0 / (embedding + num_classes))  # xavier_uniform_ for (NC, E)
    return {
        # stem weight stored (F, C) == Conv2d (out_ch, in_ch) layout -> standard matmul.
        "w_stem": 0.1 * jax.random.normal(k1, (feat_dim, c_in), jnp.float32),
        "b_stem": jnp.zeros((feat_dim,), jnp.float32),
        "w_neck": jax.random.uniform(k2, (feat_dim, embedding), jnp.float32,
                                     -bound_neck, bound_neck),
        "b_neck": jax.random.uniform(k3, (embedding,), jnp.float32,
                                     -bound_neck, bound_neck),
        "bn_gamma": jnp.ones((embedding,), jnp.float32),
        "bn_beta": jnp.zeros((embedding,), jnp.float32),
        "bn_mean": jnp.zeros((embedding,), jnp.float32),
        "bn_var": jnp.ones((embedding,), jnp.float32),
        "w_dec": jax.random.uniform(k4, (num_classes, embedding), jnp.float32,
                                    -a_xavier, a_xavier),
        # AdaFace registered buffers [batch_mean, batch_std]; updated values are returned
        # by the forward so the caller can thread them into the next step.
        "ada_buffers": jnp.array([[20.0, 100.0]], jnp.float32),
    }


if __name__ == "__main__":
    B, C, HIMG, WIMG = 2, 4, 16, 16
    FEAT_DIM, EMBEDDING, NUM_CLASSES = 64, 32, 16

    key = jax.random.PRNGKey(0)
    kx, kp = jax.random.split(key)
    x = jax.random.normal(kx, (B, C, HIMG, WIMG), jnp.float32)
    labels = jnp.array([3, 11], dtype=jnp.int32)
    params = init_params(kp, C, FEAT_DIM, EMBEDDING, NUM_CLASSES)

    fwd = jax.jit(base_model_forward)
    logits, new_buffers = fwd(x, labels, params)
    jax.block_until_ready(logits)
    jax.block_until_ready(new_buffers)
    assert logits.shape == (B, NUM_CLASSES) and logits.dtype == jnp.float32
    assert new_buffers.shape == (1, 2)
    assert bool(jnp.all(jnp.isfinite(logits)))
    print("KERNEL_OK")
</pallas_src>

<mosaic_0001>
module attributes {stable_mosaic.version = 11 : i64} {
  func.func @kernel(%arg0: i32, %arg1: i32, %arg2: memref<1x4x256xf32, #tpu.memory_space<vmem>>, %arg3: memref<64x4xf32, #tpu.memory_space<vmem>>, %arg4: memref<64x1xf32, #tpu.memory_space<vmem>>, %arg5: memref<1x64x1xf32, #tpu.memory_space<vmem>>, %arg6: memref<64x1xf32, #tpu.memory_space<vmem>>) attributes {dimension_semantics = [#tpu.dimension_semantics<parallel>, #tpu.dimension_semantics<arbitrary>], iteration_bounds = array<i64: 2, 1>, scalar_prefetch = 0 : i64, scratch_operands = 1 : i64, tpu.core_type = #tpu.core_type<tc>, window_params = [{transform_indices = @transform_0, window_bounds = array<i64: 1, 4, 256>}, {pipeline_mode = #tpu.pipeline_mode<synchronous>, transform_indices = @transform_1, window_bounds = array<i64: 64, 4>}, {pipeline_mode = #tpu.pipeline_mode<synchronous>, transform_indices = @transform_2, window_bounds = array<i64: 64, 1>}, {transform_indices = @transform_3, window_bounds = array<i64: 1, 64, 1>}]} {
    %c0_i32 = arith.constant 0 : i32
    %0 = arith.cmpi eq, %arg1, %c0_i32 : i32
    %1 = arith.extui %0 : i1 to i32
    %c0_i32_0 = arith.constant 0 : i32
    %2 = arith.cmpi ne, %1, %c0_i32_0 : i32
    scf.if %2 {
      %cst_15 = arith.constant 0.000000e+00 : f32
      %22 = vector.broadcast %cst_15 : f32 to vector<64x1xf32>
      %c0_16 = arith.constant 0 : index
      %c0_17 = arith.constant 0 : index
      %23 = vector.load %arg6[%c0_16, %c0_17] : memref<64x1xf32, #tpu.memory_space<vmem>>, vector<64x1xf32>
      tpu.vector_store %arg6[%c0_16, %c0_17], %22 {strides = array<i32>} : memref<64x1xf32, #tpu.memory_space<vmem>>, vector<64x1xf32>,
    } else {
    }
    %c0 = arith.constant 0 : index
    %c0_1 = arith.constant 0 : index
    %c0_2 = arith.constant 0 : index
    %3 = vector.load %arg2[%c0, %c0_1, %c0_2] : memref<1x4x256xf32, #tpu.memory_space<vmem>>, vector<1x4x256xf32>
    %4 = vector.shape_cast %3 : vector<1x4x256xf32> to vector<4x256xf32>
    %c0_3 = arith.constant 0 : index
    %c0_4 = arith.constant 0 : index
    %5 = vector.load %arg3[%c0_3, %c0_4] : memref<64x4xf32, #tpu.memory_space<vmem>>, vector<64x4xf32>
    %cst = arith.constant dense<0.000000e+00> : vector<64x256xf32>
    %6 = tpu.matmul %5, %4, %cst {dimension_numbers = #tpu.dot_dimension_numbers<[1], [0], [0], [1], [0, 0, 1, 1], [], []>} : vector<64x4xf32>, vector<4x256xf32>, vector<64x256xf32> -> vector<64x256xf32>
    %c0_5 = arith.constant 0 : index
    %c0_6 = arith.constant 0 : index
    %7 = vector.load %arg4[%c0_5, %c0_6] : memref<64x1xf32, #tpu.memory_space<vmem>>, vector<64x1xf32>
    %8 = vector.broadcast %7 : vector<64x1xf32> to vector<64x256xf32>
    %9 = arith.addf %6, %8 : vector<64x256xf32>
    %cst_7 = arith.constant 9.99999997E-7 : f32
    %10 = vector.broadcast %cst_7 : f32 to vector<64x256xf32>
    %11 = arith.maximumf %9, %10 : vector<64x256xf32>
    %c0_8 = arith.constant 0 : index
    %c0_9 = arith.constant 0 : index
    %12 = vector.load %arg6[%c0_8, %c0_9] : memref<64x1xf32, #tpu.memory_space<vmem>>, vector<64x1xf32>
    %13 = arith.mulf %11, %11 : vector<64x256xf32>
    %14 = arith.mulf %13, %11 : vector<64x256xf32>
    %cst_10 = arith.constant dense<0.000000e+00> : vector<64xf32>
    %15 = vector.multi_reduction <add>, %14, %cst_10 [1] : vector<64x256xf32> to vector<64xf32>
    %16 = vector.shape_cast %15 : vector<64xf32> to vector<64x1xf32>
    %17 = arith.addf %12, %16 : vector<64x1xf32>
    %c0_11 = arith.constant 0 : index
    %c0_12 = arith.constant 0 : index
    %18 = vector.load %arg6[%c0_11, %c0_12] : memref<64x1xf32, #tpu.memory_space<vmem>>, vector<64x1xf32>
    tpu.vector_store %arg6[%c0_11, %c0_12], %17 {strides = array<i32>} : memref<64x1xf32, #tpu.memory_space<vmem>>, vector<64x1xf32>,
    %c0_i32_13 = arith.constant 0 : i32
    %19 = arith.cmpi eq, %arg1, %c0_i32_13 : i32
    %20 = arith.extui %19 : i1 to i32
    %c0_i32_14 = arith.constant 0 : i32
    %21 = arith.cmpi ne, %20, %c0_i32_14 : i32
    scf.if %21 {
      %c0_15 = arith.constant 0 : index
      %c0_16 = arith.constant 0 : index
      %22 = vector.load %arg6[%c0_15, %c0_16] : memref<64x1xf32, #tpu.memory_space<vmem>>, vector<64x1xf32>
      %cst_17 = arith.constant 3.906250e-03 : f32
      %23 = vector.broadcast %cst_17 : f32 to vector<64x1xf32>
      %24 = arith.mulf %22, %23 : vector<64x1xf32>
      %25 = math.log %24 : vector<64x1xf32>
      %cst_18 = arith.constant 0.333333343 : f32
      %26 = vector.broadcast %cst_18 : f32 to vector<64x1xf32>
      %27 = arith.mulf %25, %26 : vector<64x1xf32>
      %28 = math.exp %27 : vector<64x1xf32>
      %c0_19 = arith.constant 0 : index
      %c0_20 = arith.constant 0 : index
      %c0_21 = arith.constant 0 : index
      %29 = vector.load %arg5[%c0_19, %c0_20, %c0_21] : memref<1x64x1xf32, #tpu.memory_space<vmem>>, vector<1x64x1xf32>
      %30 = vector.shape_cast %29 : vector<1x64x1xf32> to vector<64x1xf32>
      %31 = vector.shape_cast %28 : vector<64x1xf32> to vector<1x64x1xf32>
      tpu.vector_store %arg5[%c0_19, %c0_20, %c0_21], %31 {strides = array<i32>} : memref<1x64x1xf32, #tpu.memory_space<vmem>>, vector<1x64x1xf32>,
    } else {
    }
    return
  }
  func.func @transform_0(%arg0: i32, %arg1: i32) -> (i32, i32, i32) {
    %c0_i32 = arith.constant 0 : i32
    %c0_i32_0 = arith.constant 0 : i32
    return %arg0, %c0_i32, %arg1 : i32, i32, i32
  }
  func.func @transform_1(%arg0: i32, %arg1: i32) -> (i32, i32) {
    %c0_i32 = arith.constant 0 : i32
    %c0_i32_0 = arith.constant 0 : i32
    %c0_i32_1 = arith.constant 0 : i32
    return %c0_i32, %c0_i32_0 : i32, i32
  }
  func.func @transform_2(%arg0: i32, %arg1: i32) -> (i32, i32) {
    %c0_i32 = arith.constant 0 : i32
    %c0_i32_0 = arith.constant 0 : i32
    %c0_i32_1 = arith.constant 0 : i32
    return %c0_i32, %c0_i32_0 : i32, i32
  }
  func.func @transform_3(%arg0: i32, %arg1: i32) -> (i32, i32, i32) {
    %c0_i32 = arith.constant 0 : i32
    %c0_i32_0 = arith.constant 0 : i32
    %c0_i32_1 = arith.constant 0 : i32
    return %arg0, %c0_i32, %c0_i32_0 : i32, i32, i32
  }
}

module attributes {stable_mosaic.version = 11 : i64} {
  func.func @_neck_decoder_kernel(%arg0: i32, %arg1: memref<2x64xf32, #tpu.memory_space<vmem>>, %arg2: memref<64x32xf32, #tpu.memory_space<vmem>>, %arg3: memref<1x32xf32, #tpu.memory_space<vmem>>, %arg4: memref<1x32xf32, #tpu.memory_space<vmem>>, %arg5: memref<1x32xf32, #tpu.memory_space<vmem>>, %arg6: memref<1x32xf32, #tpu.memory_space<vmem>>, %arg7: memref<1x32xf32, #tpu.memory_space<vmem>>, %arg8: memref<1x2xf32, #tpu.memory_space<vmem>>, %arg9: memref<2x1xi32, #tpu.memory_space<vmem>>, %arg10: memref<128x32xf32, #tpu.memory_space<vmem>>, %arg11: memref<2x128xf32, #tpu.memory_space<vmem>>, %arg12: memref<1x2xf32, #tpu.memory_space<vmem>>, %arg13: memref<2x32xf32, #tpu.memory_space<vmem>>, %arg14: memref<2x1xf32, #tpu.memory_space<vmem>>) attributes {dimension_semantics = [#tpu.dimension_semantics<arbitrary>], iteration_bounds = array<i64: 1>, scalar_prefetch = 0 : i64, scratch_operands = 2 : i64, tpu.core_type = #tpu.core_type<tc>, window_params = [{pipeline_mode = #tpu.pipeline_mode<synchronous>, transform_indices = @transform_0, window_bounds = array<i64: 2, 64>}, {pipeline_mode = #tpu.pipeline_mode<synchronous>, transform_indices = @transform_1, window_bounds = array<i64: 64, 32>}, {pipeline_mode = #tpu.pipeline_mode<synchronous>, transform_indices = @transform_2, window_bounds = array<i64: 1, 32>}, {pipeline_mode = #tpu.pipeline_mode<synchronous>, transform_indices = @transform_3, window_bounds = array<i64: 1, 32>}, {pipeline_mode = #tpu.pipeline_mode<synchronous>, transform_indices = @transform_4, window_bounds = array<i64: 1, 32>}, {pipeline_mode = #tpu.pipeline_mode<synchronous>, transform_indices = @transform_5, window_bounds = array<i64: 1, 32>}, {pipeline_mode = #tpu.pipeline_mode<synchronous>, transform_indices = @transform_6, window_bounds = array<i64: 1, 32>}, {pipeline_mode = #tpu.pipeline_mode<synchronous>, transform_indices = @transform_7, window_bounds = array<i64: 1, 2>}, {pipeline_mode = #tpu.pipeline_mode<synchronous>, transform_indices = @transform_8, window_bounds = array<i64: 2, 1>}, {transform_indices = @transform_9, window_bounds = array<i64: 128, 32>}, {transform_indices = @transform_10, window_bounds = array<i64: 2, 128>}, {pipeline_mode = #tpu.pipeline_mode<synchronous>, transform_indices = @transform_11, window_bounds = array<i64: 1, 2>}]} {
    %c0_i32 = arith.constant 0 : i32
    %0 = arith.cmpi eq, %arg0, %c0_i32 : i32
    %1 = arith.extui %0 : i1 to i32
    %c0_i32_0 = arith.constant 0 : i32
    %2 = arith.cmpi ne, %1, %c0_i32_0 : i32
    scf.if %2 {
      %c0_18 = arith.constant 0 : index
      %c0_19 = arith.constant 0 : index
      %49 = vector.load %arg1[%c0_18, %c0_19] : memref<2x64xf32, #tpu.memory_space<vmem>>, vector<2x64xf32>
      %c0_20 = arith.constant 0 : index
      %c0_21 = arith.constant 0 : index
      %50 = vector.load %arg2[%c0_20, %c0_21] : memref<64x32xf32, #tpu.memory_space<vmem>>, vector<64x32xf32>
      %cst_22 = arith.constant dense<0.000000e+00> : vector<2x32xf32>
      %51 = tpu.matmul %49, %50, %cst_22 {dimension_numbers = #tpu.dot_dimension_numbers<[1], [0], [0], [1], [0, 0, 1, 1], [], []>} : vector<2x64xf32>, vector<64x32xf32>, vector<2x32xf32> -> vector<2x32xf32>
      %c0_23 = arith.constant 0 : index
      %c0_24 = arith.constant 0 : index
      %52 = vector.load %arg3[%c0_23, %c0_24] : memref<1x32xf32, #tpu.memory_space<vmem>>, vector<1x32xf32>
      %53 = vector.broadcast %52 : vector<1x32xf32> to vector<2x32xf32>
      %54 = arith.addf %51, %53 : vector<2x32xf32>
      %c0_25 = arith.constant 0 : index
      %c0_26 = arith.constant 0 : index
      %55 = vector.load %arg6[%c0_25, %c0_26] : memref<1x32xf32, #tpu.memory_space<vmem>>, vector<1x32xf32>
      %56 = vector.broadcast %55 : vector<1x32xf32> to vector<2x32xf32>
      %57 = arith.subf %54, %56 : vector<2x32xf32>
      %c0_27 = arith.constant 0 : index
      %c0_28 = arith.constant 0 : index
      %58 = vector.load %arg7[%c0_27, %c0_28] : memref<1x32xf32, #tpu.memory_space<vmem>>, vector<1x32xf32>
      %cst_29 = arith.constant 9.99999974E-6 : f32
      %59 = vector.broadcast %cst_29 : f32 to vector<1x32xf32>
      %60 = arith.addf %58, %59 : vector<1x32xf32>
      %61 = math.rsqrt %60 : vector<1x32xf32>
      %62 = vector.broadcast %61 : vector<1x32xf32> to vector<2x32xf32>
      %63 = arith.mulf %57, %62 : vector<2x32xf32>
      %c0_30 = arith.constant 0 : index
      %c0_31 = arith.constant 0 : index
      %64 = vector.load %arg4[%c0_30, %c0_31] : memref<1x32xf32, #tpu.memory_space<vmem>>, vector<1x32xf32>
      %65 = vector.broadcast %64 : vector<1x32xf32> to vector<2x32xf32>
      %66 = arith.mulf %63, %65 : vector<2x32xf32>
      %c0_32 = arith.constant 0 : index
      %c0_33 = arith.constant 0 : index
      %67 = vector.load %arg5[%c0_32, %c0_33] : memref<1x32xf32, #tpu.memory_space<vmem>>, vector<1x32xf32>
      %68 = vector.broadcast %67 : vector<1x32xf32> to vector<2x32xf32>
      %69 = arith.addf %66, %68 : vector<2x32xf32>
      %cst_34 = arith.constant 5.000000e-01 : f32
      %70 = vector.broadcast %cst_34 : f32 to vector<2x32xf32>
      %71 = arith.mulf %70, %69 : vector<2x32xf32>
      %cst_35 = arith.constant 0.707106769 : f32
      %72 = vector.broadcast %cst_35 : f32 to vector<2x32xf32>
      %73 = arith.mulf %69, %72 : vector<2x32xf32>
      %74 = math.erf %73 : vector<2x32xf32>
      %cst_36 = arith.constant 1.000000e+00 : f32
      %75 = vector.broadcast %cst_36 : f32 to vector<2x32xf32>
      %76 = arith.addf %75, %74 : vector<2x32xf32>
      %77 = arith.mulf %71, %76 : vector<2x32xf32>
      %78 = arith.mulf %77, %77 : vector<2x32xf32>
      %cst_37 = arith.constant dense<0.000000e+00> : vector<2xf32>
      %79 = vector.multi_reduction <add>, %78, %cst_37 [1] : vector<2x32xf32> to vector<2xf32>
      %80 = vector.shape_cast %79 : vector<2xf32> to vector<2x1xf32>
      %81 = math.sqrt %80 : vector<2x1xf32>
      %cst_38 = arith.constant 9.99999997E-7 : f32
      %82 = vector.broadcast %cst_38 : f32 to vector<2x1xf32>
      %83 = arith.maximumf %81, %82 : vector<2x1xf32>
      %84 = vector.broadcast %83 : vector<2x1xf32> to vector<2x32xf32>
      %85 = arith.divf %77, %84 : vector<2x32xf32>
      %c0_39 = arith.constant 0 : index
      %c0_40 = arith.constant 0 : index
      %86 = vector.load %arg13[%c0_39, %c0_40] : memref<2x32xf32, #tpu.memory_space<vmem>>, vector<2x32xf32>
      tpu.vector_store %arg13[%c0_39, %c0_40], %85 {strides = array<i32>} : memref<2x32xf32, #tpu.memory_space<vmem>>, vector<2x32xf32>,
      %cst_41 = arith.constant dense<0.000000e+00> : vector<1xf32>
      %87 = vector.multi_reduction <add>, %83, %cst_41 [0] : vector<2x1xf32> to vector<1xf32>
      %88 = vector.shape_cast %87 : vector<1xf32> to vector<1x1xf32>
      %cst_42 = arith.constant 2.000000e+00 : f32
      %89 = vector.broadcast %cst_42 : f32 to vector<1x1xf32>
      %90 = arith.divf %88, %89 : vector<1x1xf32>
      %91 = vector.broadcast %90 : vector<1x1xf32> to vector<2x1xf32>
      %92 = arith.subf %83, %91 : vector<2x1xf32>
      %93 = arith.mulf %92, %92 : vector<2x1xf32>
      %cst_43 = arith.constant dense<0.000000e+00> : vector<1xf32>
      %94 = vector.multi_reduction <add>, %93, %cst_43 [0] : vector<2x1xf32> to vector<1xf32>
      %95 = vector.shape_cast %94 : vector<1xf32> to vector<1x1xf32>
      %cst_44 = arith.constant 1.000000e+00 : f32
      %96 = vector.broadcast %cst_44 : f32 to vector<1x1xf32>
      %97 = arith.divf %95, %96 : vector<1x1xf32>
      %98 = math.sqrt %97 : vector<1x1xf32>
      %c0_45 = arith.constant 0 : index
      %c0_46 = arith.constant 0 : index
      %99 = vector.load %arg8[%c0_45, %c0_46] : memref<1x2xf32, #tpu.memory_space<vmem>>, vector<1x1xf32>
      %cst_47 = arith.constant 9.900000e-01 : f32
      %100 = vector.broadcast %cst_47 : f32 to vector<1x1xf32>
      %101 = arith.mulf %100, %99 : vector<1x1xf32>
      %cst_48 = arith.constant 0.00999999977 : f32
      %102 = vector.broadcast %cst_48 : f32 to vector<1x1xf32>
      %103 = arith.mulf %102, %90 : vector<1x1xf32>
      %104 = arith.addf %101, %103 : vector<1x1xf32>
      %c0_49 = arith.constant 0 : index
      %c1 = arith.constant 1 : index
      %105 = vector.load %arg8[%c0_49, %c1] : memref<1x2xf32, #tpu.memory_space<vmem>>, vector<1x1xf32>
      %cst_50 = arith.constant 9.900000e-01 : f32
      %106 = vector.broadcast %cst_50 : f32 to vector<1x1xf32>
      %107 = arith.mulf %106, %105 : vector<1x1xf32>
      %cst_51 = arith.constant 0.00999999977 : f32
      %108 = vector.broadcast %cst_51 : f32 to vector<1x1xf32>
      %109 = arith.mulf %108, %98 : vector<1x1xf32>
      %110 = arith.addf %107, %109 : vector<1x1xf32>
      %c0_52 = arith.constant 0 : index
      %c0_53 = arith.constant 0 : index
      %111 = vector.load %arg12[%c0_52, %c0_53] : memref<1x2xf32, #tpu.memory_space<vmem>>, vector<1x1xf32>
      tpu.vector_store %arg12[%c0_52, %c0_53], %104 {strides = array<i32>} : memref<1x2xf32, #tpu.memory_space<vmem>>, vector<1x1xf32>,
      %c0_54 = arith.constant 0 : index
      %c1_55 = arith.constant 1 : index
      %112 = vector.load %arg12[%c0_54, %c1_55] : memref<1x2xf32, #tpu.memory_space<vmem>>, vector<1x1xf32>
      tpu.vector_store %arg12[%c0_54, %c1_55], %110 {strides = array<i32>} : memref<1x2xf32, #tpu.memory_space<vmem>>, vector<1x1xf32>,
      %113 = vector.broadcast %104 : vector<1x1xf32> to vector<2x1xf32>
      %114 = arith.subf %83, %113 : vector<2x1xf32>
      %cst_56 = arith.constant 5.000000e-01 : f32
      %115 = vector.broadcast %cst_56 : f32 to vector<2x1xf32>
      %116 = arith.mulf %115, %114 : vector<2x1xf32>
      %cst_57 = arith.constant 9.99999997E-7 : f32
      %117 = vector.broadcast %cst_57 : f32 to vector<1x1xf32>
      %118 = arith.addf %110, %117 : vector<1x1xf32>
      %119 = vector.broadcast %118 : vector<1x1xf32> to vector<2x1xf32>
      %120 = arith.divf %116, %119 : vector<2x1xf32>
      %cst_58 = arith.constant 0.699999988 : f32
      %121 = vector.broadcast %cst_58 : f32 to vector<2x1xf32>
      %122 = arith.addf %121, %120 : vector<2x1xf32>
      %c0_59 = arith.constant 0 : index
      %c0_60 = arith.constant 0 : index
      %123 = vector.load %arg14[%c0_59, %c0_60] : memref<2x1xf32, #tpu.memory_space<vmem>>, vector<2x1xf32>
      tpu.vector_store %arg14[%c0_59, %c0_60], %122 {strides = array<i32>} : memref<2x1xf32, #tpu.memory_space<vmem>>, vector<2x1xf32>,
    } else {
    }
    %c0 = arith.constant 0 : index
    %c0_1 = arith.constant 0 : index
    %3 = vector.load %arg10[%c0, %c0_1] : memref<128x32xf32, #tpu.memory_space<vmem>>, vector<128x32xf32>
    %4 = arith.mulf %3, %3 : vector<128x32xf32>
    %cst = arith.constant dense<0.000000e+00> : vector<128xf32>
    %5 = vector.multi_reduction <add>, %4, %cst [1] : vector<128x32xf32> to vector<128xf32>
    %6 = vector.shape_cast %5 : vector<128xf32> to vector<128x1xf32>
    %cst_2 = arith.constant 1.000000e-24 : f32
    %7 = vector.broadcast %cst_2 : f32 to vector<128x1xf32>
    %8 = arith.maximumf %6, %7 : vector<128x1xf32>
    %9 = math.rsqrt %8 : vector<128x1xf32>
    %c0_3 = arith.constant 0 : index
    %c0_4 = arith.constant 0 : index
    %10 = vector.load %arg13[%c0_3, %c0_4] : memref<2x32xf32, #tpu.memory_space<vmem>>, vector<2x32xf32>
    %11 = vector.broadcast %9 : vector<128x1xf32> to vector<128x32xf32>
    %12 = arith.mulf %3, %11 : vector<128x32xf32>
    %cst_5 = arith.constant dense<0.000000e+00> : vector<2x128xf32>
    %13 = tpu.matmul %10, %12, %cst_5 {dimension_numbers = #tpu.dot_dimension_numbers<[1], [1], [0], [0], [0, 0, 1, 0], [], []>} : vector<2x32xf32>, vector<128x32xf32>, vector<2x128xf32> -> vector<2x128xf32>
    %cst_6 = arith.constant -0.999998986 : f32
    %cst_7 = arith.constant 0.999998986 : f32
    %14 = vector.broadcast %cst_6 : f32 to vector<2x128xf32>
    %15 = arith.maximumf %14, %13 : vector<2x128xf32>
    %16 = vector.broadcast %cst_7 : f32 to vector<2x128xf32>
    %17 = arith.minimumf %16, %15 : vector<2x128xf32>
    %18 = tpu.iota {dimensions = array<i32: 1>} : vector<2x128xi32>
    %c128_i32 = arith.constant 128 : i32
    %19 = arith.muli %arg0, %c128_i32 : i32
    %20 = vector.broadcast %19 : i32 to vector<2x128xi32>
    %21 = arith.addi %18, %20 : vector<2x128xi32>
    %c0_8 = arith.constant 0 : index
    %c0_9 = arith.constant 0 : index
    %22 = vector.load %arg9[%c0_8, %c0_9] : memref<2x1xi32, #tpu.memory_space<vmem>>, vector<2x1xi32>
    %23 = vector.broadcast %22 : vector<2x1xi32> to vector<2x128xi32>
    %24 = arith.cmpi eq, %21, %23 : vector<2x128xi32>
    %25 = arith.extui %24 : vector<2x128xi1> to vector<2x128xi32>
    %26 = arith.sitofp %25 : vector<2x128xi32> to vector<2x128xf32>
    %c0_10 = arith.constant 0 : index
    %c0_11 = arith.constant 0 : index
    %27 = vector.load %arg14[%c0_10, %c0_11] : memref<2x1xf32, #tpu.memory_space<vmem>>, vector<2x1xf32>
    %28 = arith.mulf %17, %17 : vector<2x128xf32>
    %cst_12 = arith.constant 1.000000e+00 : f32
    %29 = vector.broadcast %cst_12 : f32 to vector<2x128xf32>
    %30 = arith.subf %29, %28 : vector<2x128xf32>
    %cst_13 = arith.constant 0.000000e+00 : f32
    %31 = vector.broadcast %cst_13 : f32 to vector<2x128xf32>
    %32 = arith.maximumf %30, %31 : vector<2x128xf32>
    %33 = math.sqrt %32 : vector<2x128xf32>
    %34 = math.cos %27 : vector<2x1xf32>
    %35 = vector.broadcast %34 : vector<2x1xf32> to vector<2x128xf32>
    %36 = arith.mulf %17, %35 : vector<2x128xf32>
    %37 = math.sin %27 : vector<2x1xf32>
    %38 = vector.broadcast %37 : vector<2x1xf32> to vector<2x128xf32>
    %39 = arith.mulf %33, %38 : vector<2x128xf32>
    %40 = arith.subf %36, %39 : vector<2x128xf32>
    %cst_14 = arith.constant 1.000000e+00 : f32
    %41 = vector.broadcast %cst_14 : f32 to vector<2x128xf32>
    %42 = arith.subf %41, %26 : vector<2x128xf32>
    %43 = arith.mulf %17, %42 : vector<2x128xf32>
    %44 = arith.mulf %40, %26 : vector<2x128xf32>
    %45 = arith.addf %43, %44 : vector<2x128xf32>
    %cst_15 = arith.constant 3.000000e+01 : f32
    %46 = vector.broadcast %cst_15 : f32 to vector<2x128xf32>
    %47 = arith.mulf %45, %46 : vector<2x128xf32>
    %c0_16 = arith.constant 0 : index
    %c0_17 = arith.constant 0 : index
    %48 = vector.load %arg11[%c0_16, %c0_17] : memref<2x128xf32, #tpu.memory_space<vmem>>, vector<2x128xf32>
    tpu.vector_store %arg11[%c0_16, %c0_17], %47 {strides = array<i32>} : memref<2x128xf32, #tpu.memory_space<vmem>>, vector<2x128xf32>,
    return
  }
  func.func @transform_0(%arg0: i32) -> (i32, i32) {
    %c0_i32 = arith.constant 0 : i32
    %c0_i32_0 = arith.constant 0 : i32
    %c0_i32_1 = arith.constant 0 : i32
    return %c0_i32, %c0_i32_0 : i32, i32
  }
  func.func @transform_1(%arg0: i32) -> (i32, i32) {
    %c0_i32 = arith.constant 0 : i32
    %c0_i32_0 = arith.constant 0 : i32
    %c0_i32_1 = arith.constant 0 : i32
    return %c0_i32, %c0_i32_0 : i32, i32
  }
  func.func @transform_2(%arg0: i32) -> (i32, i32) {
    %c0_i32 = arith.constant 0 : i32
    %c0_i32_0 = arith.constant 0 : i32
    %c0_i32_1 = arith.constant 0 : i32
    return %c0_i32, %c0_i32_0 : i32, i32
  }
  func.func @transform_3(%arg0: i32) -> (i32, i32) {
    %c0_i32 = arith.constant 0 : i32
    %c0_i32_0 = arith.constant 0 : i32
    %c0_i32_1 = arith.constant 0 : i32
    return %c0_i32, %c0_i32_0 : i32, i32
  }
  func.func @transform_4(%arg0: i32) -> (i32, i32) {
    %c0_i32 = arith.constant 0 : i32
    %c0_i32_0 = arith.constant 0 : i32
    %c0_i32_1 = arith.constant 0 : i32
    return %c0_i32, %c0_i32_0 : i32, i32
  }
  func.func @transform_5(%arg0: i32) -> (i32, i32) {
    %c0_i32 = arith.constant 0 : i32
    %c0_i32_0 = arith.constant 0 : i32
    %c0_i32_1 = arith.constant 0 : i32
    return %c0_i32, %c0_i32_0 : i32, i32
  }
  func.func @transform_6(%arg0: i32) -> (i32, i32) {
    %c0_i32 = arith.constant 0 : i32
    %c0_i32_0 = arith.constant 0 : i32
    %c0_i32_1 = arith.constant 0 : i32
    return %c0_i32, %c0_i32_0 : i32, i32
  }
  func.func @transform_7(%arg0: i32) -> (i32, i32) {
    %c0_i32 = arith.constant 0 : i32
    %c0_i32_0 = arith.constant 0 : i32
    %c0_i32_1 = arith.constant 0 : i32
    return %c0_i32, %c0_i32_0 : i32, i32
  }
  func.func @transform_8(%arg0: i32) -> (i32, i32) {
    %c0_i32 = arith.constant 0 : i32
    %c0_i32_0 = arith.constant 0 : i32
    %c0_i32_1 = arith.constant 0 : i32
    return %c0_i32, %c0_i32_0 : i32, i32
  }
  func.func @transform_9(%arg0: i32) -> (i32, i32) {
    %c0_i32 = arith.constant 0 : i32
    %c0_i32_0 = arith.constant 0 : i32
    return %arg0, %c0_i32 : i32, i32
  }
  func.func @transform_10(%arg0: i32) -> (i32, i32) {
    %c0_i32 = arith.constant 0 : i32
    %c0_i32_0 = arith.constant 0 : i32
    return %c0_i32, %arg0 : i32, i32
  }
  func.func @transform_11(%arg0: i32) -> (i32, i32) {
    %c0_i32 = arith.constant 0 : i32
    %c0_i32_0 = arith.constant 0 : i32
    %c0_i32_1 = arith.constant 0 : i32
    return %c0_i32, %c0_i32_0 : i32, i32
  }
}

</mosaic_0001>

<llo_original>
// kernel: base_model_forward.2
$region0: #{base_model_forward.2}
  #allocation0 [shape = 'u32[]', space=smem, size = 0x4, offset = 0x4, fixed_abs, tag = 'smem constant byte address 0x4 - core index']
  #allocation1 [shape = 'u32[144,128]{1,0:T(1,128)}', space=vmem, size = 0x12000, scoped, tag = 'internal scratch']
  #allocation2 [shape = 'f32[64,1]{1,0:T(8,128)}', space=vmem, size = 0x8000, scoped, tag = 'scratch operand']
  %s0 = inlined_call_operand.vmem [shape: f32[2,4,256], index: 0, kind: input, shape index: {}]
  %s1 = inlined_call_operand.vmem [shape: f32[64,4], index: 1, kind: input, shape index: {}]
  %s2 = inlined_call_operand.vmem [shape: f32[64,1], index: 2, kind: input, shape index: {}]
  %s3 = inlined_call_operand.vmem [shape: f32[2,64,1], index: 3, kind: output, shape index: {}]
  %s4 = sld [smem:[#allocation0]]
  $region53: #{base_model_forward.2} parent=0
    _
  %s6 = ssub.s32 1, %s4
  %s7 = scalar_select 0, %s6, %s4
  loop: start=0, step=1, limit=4
  $region2: #{base_model_forward.2} parent=0 // loop_pre_header
    _
  $region3: #{base_model_forward.2} parent=0 // loop_header
    %s9 = sphi 0, %s13
    %p10 = scmp.ge.s32.totalorder %s9, 4
    %s16 = sphi 0, %s28
    %s17 = sphi 0, %s24
    %s18 = sphi 0, %s16
    %s19 = sphi 0, %s17
    %s20 = sphi 0, %s18
    %s21 = sphi 0, %s19
    %s33 = sphi 0, %s35
    %s36 = sphi 0, %s33
    %s37 = sphi 0, %s36
    %s53 = sphi 0, %s37
    %s57 = sphi 0, %s57
    %s59 = sphi 0, %s57
    %s60 = sphi 0, %s59
    %s74 = sphi 0, %s60
    %s78 = sphi 0, %s78
    %s80 = sphi 0, %s78
    %s81 = sphi 0, %s80
    %s95 = sphi 0, %s81
    %s101 = sphi 0, %s103
    %s104 = sphi 0, %s101
    %s105 = sphi 0, %s104
    %s121 = sphi 0, %s105
  $region4: #{base_model_forward.2} parent=0 // loop_header_branch
    %12 = sbr.rel (%p10) target = $region8
  $region5: #{base_model_forward.2} parent=0 // loop_body
    %s14 = ssub.s32 %s9, 1
    %s15 = ssub.s32 %s9, 2
    %s22 = sadd.s32 1, %s17
    %p23 = scmp.ge.s32.totalorder %s22, 1
    %s24 = scalar_select %p23, 0, %s22
    %s25 = sadd.s32 1, %s16
    %s26 = scalar_select %p23, %s25, %s16
    %p27 = scmp.ge.s32.totalorder %s26, 2
    %s28 = scalar_select %p27, 0, %s26
    %s29 = ssub.s32 %s16, %s28
    %s30 = ssub.s32 %s17, %s24
    %s31 = sor.u32 %s29, %s30
    %p32 = scmp.eq.s32.totalorder %s31, 0
    %s34 = sadd.s32 %s33, 1
    %s35 = scalar_select %p32, %s33, %s34
    %p38 = pneg %p32
    %p39 = scmp.eq.s32.totalorder %s9, 1
    %p40 = por %p38, %p39
    %p41 = scmp.ne.s32.totalorder %s33, %s36
    %p42 = scmp.eq.s32.totalorder %s9, 0
    %p43 = por %p41, %p42
    %p44 = scmp.ne.s32.totalorder %s33, %s36
    %p45 = scmp.eq.s32.totalorder %s14, 1
    %p46 = por %p44, %p45
    %p47 = scmp.ne.s32.totalorder %s36, %s37
    %p48 = scmp.eq.s32.totalorder %s14, 0
    %p49 = por %p47, %p48
    %p50 = scmp.ne.s32.totalorder %s36, %s37
    %p51 = scmp.eq.s32.totalorder %s15, 1
    %p52 = por %p50, %p51
    %p54 = scmp.ne.s32.totalorder %s37, %s53
    %p55 = scmp.eq.s32.totalorder %s15, 0
    %p56 = por %p54, %p55
    %s58 = sadd.s32 %s57, 1
    %p61 = scmp.eq.s32.totalorder %s9, 1
    %p62 = scmp.ne.s32.totalorder %s57, %s59
    %p63 = scmp.eq.s32.totalorder %s9, 0
    %p64 = por %p62, %p63
    %p65 = scmp.ne.s32.totalorder %s57, %s59
    %p66 = scmp.eq.s32.totalorder %s14, 1
    %p67 = por %p65, %p66
    %p68 = scmp.ne.s32.totalorder %s59, %s60
    %p69 = scmp.eq.s32.totalorder %s14, 0
    %p70 = por %p68, %p69
    %p71 = scmp.ne.s32.totalorder %s59, %s60
    %p72 = scmp.eq.s32.totalorder %s15, 1
    %p73 = por %p71, %p72
    %p75 = scmp.ne.s32.totalorder %s60, %s74
    %p76 = scmp.eq.s32.totalorder %s15, 0
    %p77 = por %p75, %p76
    %s79 = sadd.s32 %s78, 1
    %p82 = scmp.eq.s32.totalorder %s9, 1
    %p83 = scmp.ne.s32.totalorder %s78, %s80
    %p84 = scmp.eq.s32.totalorder %s9, 0
    %p85 = por %p83, %p84
    %p86 = scmp.ne.s32.totalorder %s78, %s80
    %p87 = scmp.eq.s32.totalorder %s14, 1
    %p88 = por %p86, %p87
    %p89 = scmp.ne.s32.totalorder %s80, %s81
    %p90 = scmp.eq.s32.totalorder %s14, 0
    %p91 = por %p89, %p90
    %p92 = scmp.ne.s32.totalorder %s80, %s81
    %p93 = scmp.eq.s32.totalorder %s15, 1
    %p94 = por %p92, %p93
    %p96 = scmp.ne.s32.totalorder %s81, %s95
    %p97 = scmp.eq.s32.totalorder %s15, 0
    %p98 = por %p96, %p97
    %s99 = ssub.s32 %s16, %s28
    %p100 = scmp.eq.s32.totalorder %s99, 0
    %s102 = sadd.s32 %s101, 1
    %s103 = scalar_select %p100, %s101, %s102
    %p106 = pneg %p100
    %p107 = scmp.eq.s32.totalorder %s9, 1
    %p108 = por %p106, %p107
    %p109 = scmp.ne.s32.totalorder %s101, %s104
    %p110 = scmp.eq.s32.totalorder %s9, 0
    %p111 = por %p109, %p110
    %p112 = scmp.ne.s32.totalorder %s101, %s104
    %p113 = scmp.eq.s32.totalorder %s14, 1
    %p114 = por %p112, %p113
    %p115 = scmp.ne.s32.totalorder %s104, %s105
    %p116 = scmp.eq.s32.totalorder %s14, 0
    %p117 = por %p115, %p116
    %p118 = scmp.ne.s32.totalorder %s104, %s105
    %p119 = scmp.eq.s32.totalorder %s15, 1
    %p120 = por %p118, %p119
    %p122 = scmp.ne.s32.totalorder %s105, %s121
    %p123 = scmp.eq.s32.totalorder %s15, 0
    %p124 = por %p122, %p123
    %p125 = scmp.le.s32.totalorder 1, %s9
    %p126 = scmp.lt.s32.totalorder %s9, 3
    %p127 = pnand %p125, %p126
    %p128 = pneg %p127
    // Predicated region
    $region9: #{base_model_forward.2} parent=5 // pred_check
      _
    $region10: #{base_model_forward.2} parent=5 // pred_check_branch
      %130 = sbr.rel (%p127) target = $region12
    $region11: #{base_model_forward.2} parent=5 // pred_region
      %s131 = ssub.s32 %s9, 1
      // Predicated region
      $region13: #{base_model_forward.2} parent=11 // pred_check
        %p132 = pneg %p70
      $region14: #{base_model_forward.2} parent=11 // pred_check_branch
        %134 = sbr.rel (%p132) target = $region16
      $region15: #{base_model_forward.2} parent=11 // pred_region
        _
      $region16: #{base_model_forward.2} parent=11 // pred_fallthru
        _
      // Predicated region
      $region17: #{base_model_forward.2} parent=11 // pred_check
        %p135 = pneg %p91
      $region18: #{base_model_forward.2} parent=11 // pred_check_branch
        %137 = sbr.rel (%p135) target = $region20
      $region19: #{base_model_forward.2} parent=11 // pred_region
        _
      $region20: #{base_model_forward.2} parent=11 // pred_fallthru
        _
    $region12: #{base_model_forward.2} parent=5 // pred_fallthru
      _
    %p138 = scmp.lt.s32.totalorder %s9, 2
    // Predicated region
    $region21: #{base_model_forward.2} parent=5 // pred_check
      %p139 = pneg %p138
    $region22: #{base_model_forward.2} parent=5 // pred_check_branch
      %141 = sbr.rel (%p139) target = $region24
    $region23: #{base_model_forward.2} parent=5 // pred_region
      // Predicated region
      $region25: #{base_model_forward.2} parent=23 // pred_check
        %p142 = pneg %p43
      $region26: #{base_model_forward.2} parent=23 // pred_check_branch
        %144 = sbr.rel (%p142) target = $region28
      $region27: #{base_model_forward.2} parent=23 // pred_region
        %s145 = smul.u32 2, %s17
        %p146 = scmp.lt.s32.totalorder %s16, 1
        %s147 = scalar_select %p146, %s16, 1
        %p148 = scmp.lt.s32.totalorder %s145, 1
        %s149 = scalar_select %p148, %s145, 1
        %s150 = smul.addr %s147, 2
        %s151 = sadd.s32 %s149, %s150
        %s152 = smul.addr %s151, 4
        %s153 = scalar_lea.vmem %s0, %s152
        %s154 = smul.u32 2, %s17
      $region28: #{base_model_forward.2} parent=23 // pred_fallthru
        _
    $region24: #{base_model_forward.2} parent=5 // pred_fallthru
      _
    %p155 = scmp.le.s32.totalorder 1, %s9
    %p156 = scmp.lt.s32.totalorder %s9, 3
    %p157 = pnand %p155, %p156
    %p158 = pneg %p157
    // Predicated region
    $region29: #{base_model_forward.2} parent=5 // pred_check
      _
    $region30: #{base_model_forward.2} parent=5 // pred_check_branch
      %160 = sbr.rel (%p157) target = $region32
    $region31: #{base_model_forward.2} parent=5 // pred_region
      %s161 = ssub.s32 %s9, 1
      %s162 = smul.u32 2, %s19
      %p163 = scmp.lt.s32.totalorder %s18, 1
      %s164 = scalar_select %p163, %s18, 1
      %p165 = scmp.lt.s32.totalorder %s162, 1
      %s166 = scalar_select %p165, %s162, 1
      %s167 = smul.addr %s164, 2
      %s168 = sadd.s32 %s166, %s167
      %s169 = smul.addr %s168, 4
      %s170 = scalar_lea.vmem %s0, %s169
      %p171 = pneg %p49
      %p172 = pneg %p46
      %p173 = pneg %p70
      %p174 = pneg %p67
      %p175 = pneg %p91
      %p176 = pneg %p88
      %p177 = pneg %p117
      %p178 = pneg %p114
      %p179 = scmp.lt.s32.totalorder %s18, 1
      %s180 = scalar_select %p179, %s18, 1
      %s181 = smul.addr %s180, 8
      %s182 = smul.addr %s181, 8
      %s183 = scalar_lea.vmem %s3, %s182
      %s184 = smul.u32 2, %s19
      %p185 = scmp.lt.s32.totalorder %s18, 1
      %s186 = scalar_select %p185, %s18, 1
      %p187 = scmp.lt.s32.totalorder %s184, 1
      %s188 = scalar_select %p187, %s184, 1
      %s189 = smul.addr %s186, 2
      %s190 = sadd.s32 %s188, %s189
      %s191 = smul.addr %s190, 4
      %s192 = scalar_lea.vmem %s0, %s191
      %s193 = smul.u32 2, %s19
      %p194 = scmp.lt.s32.totalorder %s18, 1
      %s195 = scalar_select %p194, %s18, 1
      %s196 = smul.addr %s195, 8
      %s197 = smul.addr %s196, 8
      %s198 = scalar_lea.vmem %s3, %s197
      %p199 = scmp.eq.s32.totalorder %s19, 0
      // Predicated region
      $region33: #{base_model_forward.2} parent=31 // pred_check
        %p200 = pneg %p199
      $region34: #{base_model_forward.2} parent=31 // pred_check_branch
        %202 = sbr.rel (%p200) target = $region36
      $region35: #{base_model_forward.2} parent=31 // pred_region
        %vm203 = vcmask 7168
        %204 = vst.msk [vmem:[#allocation2] sm:$0xff] %vm203, 0.0
        %205 = vst.msk [vmem:[#allocation2 + $0x8] sm:$0xff] %vm203, 0.0
        %206 = vst.msk [vmem:[#allocation2 + $0x10] sm:$0xff] %vm203, 0.0
        %207 = vst.msk [vmem:[#allocation2 + $0x18] sm:$0xff] %vm203, 0.0
        %208 = vst.msk [vmem:[#allocation2 + $0x20] sm:$0xff] %vm203, 0.0
        %209 = vst.msk [vmem:[#allocation2 + $0x28] sm:$0xff] %vm203, 0.0
        %210 = vst.msk [vmem:[#allocation2 + $0x30] sm:$0xff] %vm203, 0.0
        %211 = vst.msk [vmem:[#allocation2 + $0x38] sm:$0xff] %vm203, 0.0
      $region36: #{base_model_forward.2} parent=31 // pred_fallthru
        _
      %v212 = vld [vmem:[%s192] sm:$0xff]
      %v213 = vld [vmem:[%s1] sm:$0xff]
      %v214 = vld [vmem:[%s1 + $0x8] sm:$0xff]
      %v215 = vld [vmem:[%s1 + $0x10] sm:$0xff]
      %v216 = vld [vmem:[%s1 + $0x18] sm:$0xff]
      %v217 = vld [vmem:[%s1 + $0x20] sm:$0xff]
      %v218 = vld [vmem:[%s1 + $0x28] sm:$0xff]
      %v219 = vld [vmem:[%s1 + $0x30] sm:$0xff]
      %v220 = vld [vmem:[%s1 + $0x38] sm:$0xff]
      %v221 = vld [vmem:[%s2] sm:$0xff]
      %v222 = vld [vmem:[%s2 + $0x8] sm:$0xff]
      %v223 = vld [vmem:[%s2 + $0x10] sm:$0xff]
      %v224 = vld [vmem:[%s2 + $0x18] sm:$0xff]
      %v225 = vld [vmem:[%s2 + $0x20] sm:$0xff]
      %v226 = vld [vmem:[%s2 + $0x28] sm:$0xff]
      %v227 = vld [vmem:[%s2 + $0x30] sm:$0xff]
      %v228 = vld [vmem:[%s2 + $0x38] sm:$0xff]
      %230 = vset.pattern.permute.xlu0 0
      %231 = vperm.xlu0 %230, %v221
      %v232 = vpop.permute.xlu0 %231
      %235 = vset.pattern.permute.xlu0 0
      %236 = vperm.xlu0 %235, %v222
      %v237 = vpop.permute.xlu0 %236
      %240 = vset.pattern.permute.xlu0 0
      %241 = vperm.xlu0 %240, %v223
      %v242 = vpop.permute.xlu0 %241
      %245 = vset.pattern.permute.xlu0 0
      %246 = vperm.xlu0 %245, %v224
      %v247 = vpop.permute.xlu0 %246
      %250 = vset.pattern.permute.xlu0 0
      %251 = vperm.xlu0 %250, %v225
      %v252 = vpop.permute.xlu0 %251
      %255 = vset.pattern.permute.xlu0 0
      %256 = vperm.xlu0 %255, %v226
      %v257 = vpop.permute.xlu0 %256
      %260 = vset.pattern.permute.xlu0 0
      %261 = vperm.xlu0 %260, %v227
      %v262 = vpop.permute.xlu0 %261
      %265 = vset.pattern.permute.xlu0 0
      %266 = vperm.xlu0 %265, %v228
      %v267 = vpop.permute.xlu0 %266
      %v270 = vcombine.high %v212, %v212
      %vm271 = vcmask 31744
      %v273 = vsel %vm271, %v213, 0
      %v276 = vsel %vm271, %v214, 0
      %v279 = vsel %vm271, %v215, 0
      %v282 = vsel %vm271, %v216, 0
      %v285 = vsel %vm271, %v217, 0
      %v288 = vsel %vm271, %v218, 0
      %v291 = vsel %vm271, %v219, 0
      %v294 = vsel %vm271, %v220, 0
      %vm296 = vcmask 1043456
      %v297 = vsel %vm296, %v212, 0
      %v299 = vsel %vm296, %v270, 0
      %301 = vmatprep.subr.mxu0 0.0
      %302 = vmatpush1.msra.mxu0 0.0
      %303 = vmatprep.subr.mxu0 0.0
      %304 = vmatpush1.msra.mxu0 0.0
      %305 = vmatprep.subr.mxu0 0.0
      %306 = vmatpush1.msra.mxu0 0.0
      %307 = vmatprep.subr.mxu0 0.0
      %308 = vmatpush1.msra.mxu0 0.0
      %309 = vmatprep.subr.mxu0 0.0
      %310 = vmatpush1.msra.mxu0 0.0
      %311 = vmatprep.subr.mxu0 0.0
      %312 = vmatpush1.msra.mxu0 0.0
      %313 = vmatprep.subr.mxu0 0.0
      %314 = vmatpush1.msra.mxu0 0.0
      %315 = vmatprep.subr.mxu0 0.0
      %316 = vmatpush1.msra.mxu0 0.0
      %317 = vmatprep.subr.mxu0 0.0
      %318 = vmatpush1.msra.mxu0 0.0
      %319 = vmatprep.subr.mxu0 0.0
      %320 = vmatpush1.msra.mxu0 0.0
      %321 = vmatprep.subr.mxu0 0.0
      %322 = vmatpush1.msra.mxu0 0.0
      %323 = vmatprep.subr.mxu0 0.0
      %324 = vmatpush1.msra.mxu0 0.0
      %325 = vmatprep.subr.mxu0 0.0
      %326 = vmatpush1.msra.mxu0 0.0
      %327 = vmatprep.subr.mxu0 0.0
      %328 = vmatpush1.msra.mxu0 0.0
      %329 = vmatprep.subr.mxu0 0.0
      %330 = vmatpush1.msra.mxu0 0.0
      %331 = vmatprep.subr.mxu0 %v299
      %332 = vmatpush1.msra.mxu0 %v297
      %333 = vmatprep.subr.mxu0 0.0
      %334 = vmatpush2.msra.mxu0 0.0
      %335 = vmatprep.subr.mxu0 0.0
      %336 = vmatpush2.msra.mxu0 0.0
      %337 = vmatprep.subr.mxu0 0.0
      %338 = vmatpush2.msra.mxu0 0.0
      %339 = vmatprep.subr.mxu0 0.0
      %340 = vmatpush2.msra.mxu0 0.0
      %341 = vmatprep.subr.mxu0 0.0
      %342 = vmatpush2.msra.mxu0 0.0
      %343 = vmatprep.subr.mxu0 0.0
      %344 = vmatpush2.msra.mxu0 0.0
      %345 = vmatprep.subr.mxu0 0.0
      %346 = vmatpush2.msra.mxu0 0.0
      %347 = vmatprep.subr.mxu0 0.0
      %348 = vmatpush2.msra.mxu0 0.0
      %349 = vmatprep.subr.mxu0 0.0
      %350 = vmatpush2.msra.mxu0 0.0
      %351 = vmatprep.subr.mxu0 0.0
      %352 = vmatpush2.msra.mxu0 0.0
      %353 = vmatprep.subr.mxu0 0.0
      %354 = vmatpush2.msra.mxu0 0.0
      %355 = vmatprep.subr.mxu0 0.0
      %356 = vmatpush2.msra.mxu0 0.0
      %357 = vmatprep.subr.mxu0 0.0
      %358 = vmatpush2.msra.mxu0 0.0
      %359 = vmatprep.subr.mxu0 0.0
      %360 = vmatpush2.msra.mxu0 0.0
      %361 = vmatprep.subr.mxu0 0.0
      %362 = vmatpush2.msra.mxu0 0.0
      %363 = vmatprep.subr.mxu0 0.0
      %364 = vmatpush2.msra.mxu0 0.0
      %365 = vmatprep.mubr.f32.mxu0 0.0
      %366 = vmatmul.mubr.f32.gmra.mxu0 %v273
      %v367 = vpop.f32.mrf.mxu0
      %v368 = vadd.f32 %v232, %v367
      %v369 = vpop.f32.mrf.mxu0
      %v370 = vadd.f32 %v232, %v369
      %371 = vmatprep.mubr.f32.mxu0 0.0
      %372 = vmatmul.mubr.f32.gmra.mxu0 %v276
      %v373 = vpop.f32.mrf.mxu0
      %v374 = vadd.f32 %v237, %v373
      %v375 = vpop.f32.mrf.mxu0
      %v376 = vadd.f32 %v237, %v375
      %377 = vmatprep.mubr.f32.mxu0 0.0
      %378 = vmatmul.mubr.f32.gmra.mxu0 %v279
      %v379 = vpop.f32.mrf.mxu0
      %v380 = vadd.f32 %v242, %v379
      %v381 = vpop.f32.mrf.mxu0
      %v382 = vadd.f32 %v242, %v381
      %383 = vmatprep.mubr.f32.mxu0 0.0
      %384 = vmatmul.mubr.f32.gmra.mxu0 %v282
      %v385 = vpop.f32.mrf.mxu0
      %v386 = vadd.f32 %v247, %v385
      %v387 = vpop.f32.mrf.mxu0
      %v388 = vadd.f32 %v247, %v387
      %389 = vmatprep.mubr.f32.mxu0 0.0
      %390 = vmatmul.mubr.f32.gmra.mxu0 %v285
      %v391 = vpop.f32.mrf.mxu0
      %v392 = vadd.f32 %v252, %v391
      %v393 = vpop.f32.mrf.mxu0
      %v394 = vadd.f32 %v252, %v393
      %395 = vmatprep.mubr.f32.mxu0 0.0
      %396 = vmatmul.mubr.f32.gmra.mxu0 %v288
      %v397 = vpop.f32.mrf.mxu0
      %v398 = vadd.f32 %v257, %v397
      %v399 = vpop.f32.mrf.mxu0
      %v400 = vadd.f32 %v257, %v399
      %401 = vmatprep.mubr.f32.mxu0 0.0
      %402 = vmatmul.mubr.f32.gmra.mxu0 %v291
      %v403 = vpop.f32.mrf.mxu0
      %v404 = vadd.f32 %v262, %v403
      %v405 = vpop.f32.mrf.mxu0
      %v406 = vadd.f32 %v262, %v405
      %407 = vmatprep.mubr.f32.mxu0 0.0
      %408 = vmatmul.mubr.f32.gmra.mxu0 %v294
      %v409 = vpop.f32.mrf.mxu0
      %v410 = vadd.f32 %v267, %v409
      %v411 = vpop.f32.mrf.mxu0
      %v412 = vadd.f32 %v267, %v411
      %413 = vdwg.mxu0
      %v414 = vmax.f32 %v368, 1e-06
      %v415 = vmax.f32 %v370, 1e-06
      %v416 = vmax.f32 %v374, 1e-06
      %v417 = vmax.f32 %v376, 1e-06
      %v418 = vmax.f32 %v380, 1e-06
      %v419 = vmax.f32 %v382, 1e-06
      %v420 = vmax.f32 %v386, 1e-06
      %v421 = vmax.f32 %v388, 1e-06
      %v422 = vmax.f32 %v392, 1e-06
      %v423 = vmax.f32 %v394, 1e-06
      %v424 = vmax.f32 %v398, 1e-06
      %v425 = vmax.f32 %v400, 1e-06
      %v426 = vmax.f32 %v404, 1e-06
      %v427 = vmax.f32 %v406, 1e-06
      %v428 = vmax.f32 %v410, 1e-06
      %v429 = vmax.f32 %v412, 1e-06
      %v430 = vld [vmem:[#allocation2] sm:$0xff]
      %v431 = vld [vmem:[#allocation2 + $0x8] sm:$0xff]
      %v432 = vld [vmem:[#allocation2 + $0x10] sm:$0xff]
      %v433 = vld [vmem:[#allocation2 + $0x18] sm:$0xff]
      %v434 = vld [vmem:[#allocation2 + $0x20] sm:$0xff]
      %v435 = vld [vmem:[#allocation2 + $0x28] sm:$0xff]
      %v436 = vld [vmem:[#allocation2 + $0x30] sm:$0xff]
      %v437 = vld [vmem:[#allocation2 + $0x38] sm:$0xff]
      %v438 = vmul.f32 %v414, %v414
      %v439 = vmul.f32 %v415, %v415
      %v440 = vmul.f32 %v416, %v416
      %v441 = vmul.f32 %v417, %v417
      %v442 = vmul.f32 %v418, %v418
      %v443 = vmul.f32 %v419, %v419
      %v444 = vmul.f32 %v420, %v420
      %v445 = vmul.f32 %v421, %v421
      %v446 = vmul.f32 %v422, %v422
      %v447 = vmul.f32 %v423, %v423
      %v448 = vmul.f32 %v424, %v424
      %v449 = vmul.f32 %v425, %v425
      %v450 = vmul.f32 %v426, %v426
      %v451 = vmul.f32 %v427, %v427
      %v452 = vmul.f32 %v428, %v428
      %v453 = vmul.f32 %v429, %v429
      %v454 = vmul.f32 %v438, %v414
      %v455 = vmul.f32 %v439, %v415
      %v456 = vmul.f32 %v440, %v416
      %v457 = vmul.f32 %v441, %v417
      %v458 = vmul.f32 %v442, %v418
      %v459 = vmul.f32 %v443, %v419
      %v460 = vmul.f32 %v444, %v420
      %v461 = vmul.f32 %v445, %v421
      %v462 = vmul.f32 %v446, %v422
      %v463 = vmul.f32 %v447, %v423
      %v464 = vmul.f32 %v448, %v424
      %v465 = vmul.f32 %v449, %v425
      %v466 = vmul.f32 %v450, %v426
      %v467 = vmul.f32 %v451, %v427
      %v468 = vmul.f32 %v452, %v428
      %v469 = vmul.f32 %v453, %v429
      %v470 = vadd.f32 %v454, %v455
      %471 = vadd.xlane.f32.xlu0 %v470
      %v472 = vpop.xlane.xlu0 %471
      %v473 = vadd.f32 %v456, %v457
      %474 = vadd.xlane.f32.xlu0 %v473
      %v475 = vpop.xlane.xlu0 %474
      %v476 = vadd.f32 %v458, %v459
      %477 = vadd.xlane.f32.xlu0 %v476
      %v478 = vpop.xlane.xlu0 %477
      %v479 = vadd.f32 %v460, %v461
      %480 = vadd.xlane.f32.xlu0 %v479
      %v481 = vpop.xlane.xlu0 %480
      %v482 = vadd.f32 %v462, %v463
      %483 = vadd.xlane.f32.xlu0 %v482
      %v484 = vpop.xlane.xlu0 %483
      %v485 = vadd.f32 %v464, %v465
      %486 = vadd.xlane.f32.xlu0 %v485
      %v487 = vpop.xlane.xlu0 %486
      %v488 = vadd.f32 %v466, %v467
      %489 = vadd.xlane.f32.xlu0 %v488
      %v490 = vpop.xlane.xlu0 %489
      %v491 = vadd.f32 %v468, %v469
      %492 = vadd.xlane.f32.xlu0 %v491
      %v493 = vpop.xlane.xlu0 %492
      %v494 = vadd.f32 %v430, %v472
      %v495 = vadd.f32 %v431, %v475
      %v496 = vadd.f32 %v432, %v478
      %v497 = vadd.f32 %v433, %v481
      %v498 = vadd.f32 %v434, %v484
      %v499 = vadd.f32 %v435, %v487
      %v500 = vadd.f32 %v436, %v490
      %v501 = vadd.f32 %v437, %v493
      %vm502 = vcmask 7168
      %503 = vst.msk [vmem:[#allocation2] sm:$0xff] %vm502, %v494
      %504 = vst.msk [vmem:[#allocation2 + $0x8] sm:$0xff] %vm502, %v495
      %505 = vst.msk [vmem:[#allocation2 + $0x10] sm:$0xff] %vm502, %v496
      %506 = vst.msk [vmem:[#allocation2 + $0x18] sm:$0xff] %vm502, %v497
      %507 = vst.msk [vmem:[#allocation2 + $0x20] sm:$0xff] %vm502, %v498
      %508 = vst.msk [vmem:[#allocation2 + $0x28] sm:$0xff] %vm502, %v499
      %509 = vst.msk [vmem:[#allocation2 + $0x30] sm:$0xff] %vm502, %v500
      %510 = vst.msk [vmem:[#allocation2 + $0x38] sm:$0xff] %vm502, %v501
      // Predicated region
      $region37: #{base_model_forward.2} parent=31 // pred_check
        %p511 = pneg %p199
      $region38: #{base_model_forward.2} parent=31 // pred_check_branch
        %513 = sbr.rel (%p511) target = $region40
      $region39: #{base_model_forward.2} parent=31 // pred_region
        %v514 = vld [vmem:[#allocation2] sm:$0xff]
        %v515 = vld [vmem:[#allocation2 + $0x8] sm:$0xff]
        %v516 = vld [vmem:[#allocation2 + $0x10] sm:$0xff]
        %v517 = vld [vmem:[#allocation2 + $0x18] sm:$0xff]
        %v518 = vld [vmem:[#allocation2 + $0x20] sm:$0xff]
        %v519 = vld [vmem:[#allocation2 + $0x28] sm:$0xff]
        %v520 = vld [vmem:[#allocation2 + $0x30] sm:$0xff]
        %v521 = vld [vmem:[#allocation2 + $0x38] sm:$0xff]
        %v522 = vmul.f32 %v514, 0.00390625
        %v523 = vmul.f32 %v515, 0.00390625
        %v524 = vmul.f32 %v516, 0.00390625
        %v525 = vmul.f32 %v517, 0.00390625
        %v526 = vmul.f32 %v518, 0.00390625
        %v527 = vmul.f32 %v519, 0.00390625
        %v528 = vmul.f32 %v520, 0.00390625
        %v529 = vmul.f32 %v521, 0.00390625
        %v530 = vlog2.pop %v522
        %v531 = vmul.f32 %v530, 0.6931472
        %v532 = vlog2.pop %v523
        %v533 = vmul.f32 %v532, 0.6931472
        %v534 = vlog2.pop %v524
        %v535 = vmul.f32 %v534, 0.6931472
        %v536 = vlog2.pop %v525
        %v537 = vmul.f32 %v536, 0.6931472
        %v538 = vlog2.pop %v526
        %v539 = vmul.f32 %v538, 0.6931472
        %v540 = vlog2.pop %v527
        %v541 = vmul.f32 %v540, 0.6931472
        %v542 = vlog2.pop %v528
        %v543 = vmul.f32 %v542, 0.6931472
        %v544 = vlog2.pop %v529
        %v545 = vmul.f32 %v544, 0.6931472
        %v546 = vmul.f32 %v531, 0.33333334
        %v547 = vmul.f32 %v533, 0.33333334
        %v548 = vmul.f32 %v535, 0.33333334
        %v549 = vmul.f32 %v537, 0.33333334
        %v550 = vmul.f32 %v539, 0.33333334
        %v551 = vmul.f32 %v541, 0.33333334
        %v552 = vmul.f32 %v543, 0.33333334
        %v553 = vmul.f32 %v545, 0.33333334
        %v554 = vmul.f32 %v546, 1.442695
        %v555 = vpow.pop %v554
        %v556 = vmul.f32 %v547, 1.442695
        %v557 = vpow.pop %v556
        %v558 = vmul.f32 %v548, 1.442695
        %v559 = vpow.pop %v558
        %v560 = vmul.f32 %v549, 1.442695
        %v561 = vpow.pop %v560
        %v562 = vmul.f32 %v550, 1.442695
        %v563 = vpow.pop %v562
        %v564 = vmul.f32 %v551, 1.442695
        %v565 = vpow.pop %v564
        %v566 = vmul.f32 %v552, 1.442695
        %v567 = vpow.pop %v566
        %v568 = vmul.f32 %v553, 1.442695
        %v569 = vpow.pop %v568
        %570 = vst.msk [vmem:[%s198] sm:$0xff] %vm502, %v555
        %571 = vst.msk [vmem:[%s198 + $0x8] sm:$0xff] %vm502, %v557
        %572 = vst.msk [vmem:[%s198 + $0x10] sm:$0xff] %vm502, %v559
        %573 = vst.msk [vmem:[%s198 + $0x18] sm:$0xff] %vm502, %v561
        %574 = vst.msk [vmem:[%s198 + $0x20] sm:$0xff] %vm502, %v563
        %575 = vst.msk [vmem:[%s198 + $0x28] sm:$0xff] %vm502, %v565
        %576 = vst.msk [vmem:[%s198 + $0x30] sm:$0xff] %vm502, %v567
        %577 = vst.msk [vmem:[%s198 + $0x38] sm:$0xff] %vm502, %v569
      $region40: #{base_model_forward.2} parent=31 // pred_fallthru
        _
      %p578 = scmp.lt.s32.totalorder %s18, 1
      %s579 = scalar_select %p578, %s18, 1
      %s580 = smul.addr %s579, 8
      %s581 = smul.addr %s580, 8
      %s582 = scalar_lea.vmem %s3, %s581
      // Predicated region
      $region41: #{base_model_forward.2} parent=31 // pred_check
        %p583 = pneg %p114
      $region42: #{base_model_forward.2} parent=31 // pred_check_branch
        %585 = sbr.rel (%p583) target = $region44
      $region43: #{base_model_forward.2} parent=31 // pred_region
        _
      $region44: #{base_model_forward.2} parent=31 // pred_fallthru
        _
    $region32: #{base_model_forward.2} parent=5 // pred_fallthru
      _
    %p586 = scmp.le.s32.totalorder 2, %s9
    // Predicated region
    $region45: #{base_model_forward.2} parent=5 // pred_check
      %p587 = pneg %p586
    $region46: #{base_model_forward.2} parent=5 // pred_check_branch
      %589 = sbr.rel (%p587) target = $region48
    $region47: #{base_model_forward.2} parent=5 // pred_region
      %s590 = ssub.s32 %s9, 2
      // Predicated region
      $region49: #{base_model_forward.2} parent=47 // pred_check
        %p591 = pneg %p120
      $region50: #{base_model_forward.2} parent=47 // pred_check_branch
        %593 = sbr.rel (%p591) target = $region52
      $region51: #{base_model_forward.2} parent=47 // pred_region
        %p594 = scmp.lt.s32.totalorder %s20, 1
        %s595 = scalar_select %p594, %s20, 1
        %s596 = smul.addr %s595, 8
        %s597 = smul.addr %s596, 8
        %s598 = scalar_lea.vmem %s3, %s597
      $region52: #{base_model_forward.2} parent=47 // pred_fallthru
        _
    $region48: #{base_model_forward.2} parent=5 // pred_fallthru
      _
  $region6: #{base_model_forward.2} parent=0 // loop_footer
    %s13 = sadd.s32 1, %s9
  $region7: #{base_model_forward.2} parent=0 // loop_footer_branch
    %8 = sbr.rel target = $region3
  $region8: #{base_model_forward.2} parent=0 // loop_exit
    _

// kernel: base_model_forward.3
$region0: #{base_model_forward.3}
  #allocation0 [shape = 'u32[]', space=smem, size = 0x4, offset = 0x4, fixed_abs, tag = 'smem constant byte address 0x4 - core index']
  #allocation1 [shape = 'u32[144,128]{1,0:T(1,128)}', space=vmem, size = 0x12000, scoped, tag = 'internal scratch']
  #allocation2 [shape = 'f32[2,32]{1,0:T(2,128)}', space=vmem, size = 0x400, scoped, tag = 'scratch operand']
  #allocation3 [shape = 'f32[2,1]{1,0:T(2,128)}', space=vmem, size = 0x400, scoped, tag = 'scratch operand']
  %s0 = inlined_call_operand.vmem [shape: f32[2,64], index: 0, kind: input, shape index: {}]
  %s1 = inlined_call_operand.vmem [shape: f32[64,32], index: 1, kind: input, shape index: {}]
  %s2 = inlined_call_operand.vmem [shape: f32[1,32], index: 2, kind: input, shape index: {}]
  %s3 = inlined_call_operand.vmem [shape: f32[1,32], index: 3, kind: input, shape index: {}]
  %s4 = inlined_call_operand.vmem [shape: f32[1,32], index: 4, kind: input, shape index: {}]
  %s5 = inlined_call_operand.vmem [shape: f32[1,32], index: 5, kind: input, shape index: {}]
  %s6 = inlined_call_operand.vmem [shape: f32[1,32], index: 6, kind: input, shape index: {}]
  %s7 = inlined_call_operand.vmem [shape: f32[1,2], index: 7, kind: input, shape index: {}]
  %s8 = inlined_call_operand.vmem [shape: s32[2,1], index: 8, kind: input, shape index: {}]
  %s9 = inlined_call_operand.vmem [shape: f32[128,32], index: 9, kind: input, shape index: {}]
  %s10 = inlined_call_operand.hbm [shape: f32[2,128], index: 10, kind: output, shape index: {0}]
  %s11 = inlined_call_operand.hbm [shape: f32[1,2], index: 11, kind: output, shape index: {1}]
  %12 = xla_tuple %s10, %s11
  %s13 = sld [smem:[#allocation0]]
  $region62: #{base_model_forward.3} parent=0
    _
  %s15 = ssub.s32 1, %s13
  %s16 = scalar_select 0, %s15, %s13
  $region1: #{base_model_forward.3} parent=0
    #allocation4 [shape = 'u8[1024]{0}', space=vmem, size = 0x400, scoped, tag = 'output window, operand 0, single buffered']
    #allocation5 [shape = 's32[1]{0}', space=sflag, size = 0x4, scoped, tag = 'scoped memory for base_model_forward.3']
    #allocation6 [shape = 'u8[512]{0}', space=vmem, size = 0x400, scoped, tag = 'output window, operand 1, single buffered']
    #allocation7 [shape = 's32[1]{0}', space=sflag, size = 0x4, scoped, tag = 'scoped memory for base_model_forward.3']
    %17 = vsyncpa [#allocation5], 0
    %18 = vsyncpa [#allocation7], 0
    // Predicated region
    $region2: #{base_model_forward.3} parent=1 // pred_check
      _
    $region3: #{base_model_forward.3} parent=1 // pred_check_branch
      %20 = sbr.rel (0) target = $region5
    $region4: #{base_model_forward.3} parent=1 // pred_region
      _
    $region5: #{base_model_forward.3} parent=1 // pred_fallthru
      _
    // Predicated region
    $region6: #{base_model_forward.3} parent=1 // pred_check
      _
    $region7: #{base_model_forward.3} parent=1 // pred_check_branch
      %22 = sbr.rel (0) target = $region9
    $region8: #{base_model_forward.3} parent=1 // pred_region
      _
    $region9: #{base_model_forward.3} parent=1 // pred_fallthru
      _
    // Predicated region
    $region10: #{base_model_forward.3} parent=1 // pred_check
      _
    $region11: #{base_model_forward.3} parent=1 // pred_check_branch
      %24 = sbr.rel (0) target = $region13
    $region12: #{base_model_forward.3} parent=1 // pred_region
      _
    $region13: #{base_model_forward.3} parent=1 // pred_fallthru
      _
    // Predicated region
    $region14: #{base_model_forward.3} parent=1 // pred_check
      _
    $region15: #{base_model_forward.3} parent=1 // pred_check_branch
      %26 = sbr.rel (0) target = $region17
    $region16: #{base_model_forward.3} parent=1 // pred_region
      _
    $region17: #{base_model_forward.3} parent=1 // pred_fallthru
      _
    // Predicated region
    $region18: #{base_model_forward.3} parent=1 // pred_check
      _
    $region19: #{base_model_forward.3} parent=1 // pred_check_branch
      %28 = sbr.rel (0) target = $region21
    $region20: #{base_model_forward.3} parent=1 // pred_region
      _
    $region21: #{base_model_forward.3} parent=1 // pred_fallthru
      _
    // Predicated region
    $region22: #{base_model_forward.3} parent=1 // pred_check
      _
    $region23: #{base_model_forward.3} parent=1 // pred_check_branch
      %30 = sbr.rel (0) target = $region25
    $region24: #{base_model_forward.3} parent=1 // pred_region
      _
    $region25: #{base_model_forward.3} parent=1 // pred_fallthru
      _
    // Predicated region
    $region26: #{base_model_forward.3} parent=1 // pred_check
      _
    $region27: #{base_model_forward.3} parent=1 // pred_check_branch
      %32 = sbr.rel (0) target = $region29
    $region28: #{base_model_forward.3} parent=1 // pred_region
      _
    $region29: #{base_model_forward.3} parent=1 // pred_fallthru
      _
    // Predicated region
    $region30: #{base_model_forward.3} parent=1 // pred_check
      _
    $region31: #{base_model_forward.3} parent=1 // pred_check_branch
      %34 = sbr.rel (0) target = $region33
    $region32: #{base_model_forward.3} parent=1 // pred_region
      _
    $region33: #{base_model_forward.3} parent=1 // pred_fallthru
      _
    // Predicated region
    $region34: #{base_model_forward.3} parent=1 // pred_check
      _
    $region35: #{base_model_forward.3} parent=1 // pred_check_branch
      %36 = sbr.rel (0) target = $region37
    $region36: #{base_model_forward.3} parent=1 // pred_region
      _
    $region37: #{base_model_forward.3} parent=1 // pred_fallthru
      _
    // Predicated region
    $region38: #{base_model_forward.3} parent=1 // pred_check
      _
    $region39: #{base_model_forward.3} parent=1 // pred_check_branch
      %38 = sbr.rel (0) target = $region41
    $region40: #{base_model_forward.3} parent=1 // pred_region
      _
    $region41: #{base_model_forward.3} parent=1 // pred_fallthru
      _
    %p39 = scmp.eq.s32.totalorder 0, 0
    // Predicated region
    $region42: #{base_model_forward.3} parent=1 // pred_check
      %p40 = pneg %p39
    $region43: #{base_model_forward.3} parent=1 // pred_check_branch
      %42 = sbr.rel (%p40) target = $region45
    $region44: #{base_model_forward.3} parent=1 // pred_region
      %v43 = vld [vmem:[%s0] sm:$0x3]
      %v44 = vld [vmem:[%s1] sm:$0xff]
      %v45 = vld [vmem:[%s1 + $0x8] sm:$0xff]
      %v46 = vld [vmem:[%s1 + $0x10] sm:$0xff]
      %v47 = vld [vmem:[%s1 + $0x18] sm:$0xff]
      %v48 = vld [vmem:[%s1 + $0x20] sm:$0xff]
      %v49 = vld [vmem:[%s1 + $0x28] sm:$0xff]
      %v50 = vld [vmem:[%s1 + $0x30] sm:$0xff]
      %v51 = vld [vmem:[%s1 + $0x38] sm:$0xff]
      %v52 = vld [vmem:[%s2] sm:$0x1]
      %v54 = vlaneseq
      %v55 = vshrl.u32 %v54, 7
      %v56 = vsub.s32 0, %v55
      %v57 = vrot.slane %v52, %v56
      %vm59 = vcmask 523264
      %v61 = vsel %vm59, %v43, 0
      %63 = vmatprep.subr.mxu0 0.0
      %64 = vmatpush1.msra.mxu0 0.0
      %65 = vmatprep.subr.mxu0 0.0
      %66 = vmatpush1.msra.mxu0 0.0
      %67 = vmatprep.subr.mxu0 0.0
      %68 = vmatpush1.msra.mxu0 0.0
      %69 = vmatprep.subr.mxu0 0.0
      %70 = vmatpush1.msra.mxu0 0.0
      %71 = vmatprep.subr.mxu0 0.0
      %72 = vmatpush1.msra.mxu0 0.0
      %73 = vmatprep.subr.mxu0 0.0
      %74 = vmatpush1.msra.mxu0 0.0
      %75 = vmatprep.subr.mxu0 0.0
      %76 = vmatpush1.msra.mxu0 0.0
      %77 = vmatprep.subr.mxu0 0.0
      %78 = vmatpush1.msra.mxu0 0.0
      %79 = vmatprep.subr.mxu0 0.0
      %80 = vmatpush1.msra.mxu0 %v51
      %81 = vmatprep.subr.mxu0 0.0
      %82 = vmatpush1.msra.mxu0 %v50
      %83 = vmatprep.subr.mxu0 0.0
      %84 = vmatpush1.msra.mxu0 %v49
      %85 = vmatprep.subr.mxu0 0.0
      %86 = vmatpush1.msra.mxu0 %v48
      %87 = vmatprep.subr.mxu0 0.0
      %88 = vmatpush1.msra.mxu0 %v47
      %89 = vmatprep.subr.mxu0 0.0
      %90 = vmatpush1.msra.mxu0 %v46
      %91 = vmatprep.subr.mxu0 0.0
      %92 = vmatpush1.msra.mxu0 %v45
      %93 = vmatprep.subr.mxu0 0.0
      %94 = vmatpush1.msra.mxu0 %v44
      %95 = vmatprep.subr.mxu0 0.0
      %96 = vmatpush2.msra.mxu0 0.0
      %97 = vmatprep.subr.mxu0 0.0
      %98 = vmatpush2.msra.mxu0 0.0
      %99 = vmatprep.subr.mxu0 0.0
      %100 = vmatpush2.msra.mxu0 0.0
      %101 = vmatprep.subr.mxu0 0.0
      %102 = vmatpush2.msra.mxu0 0.0
      %103 = vmatprep.subr.mxu0 0.0
      %104 = vmatpush2.msra.mxu0 0.0
      %105 = vmatprep.subr.mxu0 0.0
      %106 = vmatpush2.msra.mxu0 0.0
      %107 = vmatprep.subr.mxu0 0.0
      %108 = vmatpush2.msra.mxu0 0.0
      %109 = vmatprep.subr.mxu0 0.0
      %110 = vmatpush2.msra.mxu0 0.0
      %111 = vmatprep.subr.mxu0 0.0
      %112 = vmatpush2.msra.mxu0 0.0
      %113 = vmatprep.subr.mxu0 0.0
      %114 = vmatpush2.msra.mxu0 0.0
      %115 = vmatprep.subr.mxu0 0.0
      %116 = vmatpush2.msra.mxu0 0.0
      %117 = vmatprep.subr.mxu0 0.0
      %118 = vmatpush2.msra.mxu0 0.0
      %119 = vmatprep.subr.mxu0 0.0
      %120 = vmatpush2.msra.mxu0 0.0
      %121 = vmatprep.subr.mxu0 0.0
      %122 = vmatpush2.msra.mxu0 0.0
      %123 = vmatprep.subr.mxu0 0.0
      %124 = vmatpush2.msra.mxu0 0.0
      %125 = vmatprep.subr.mxu0 0.0
      %126 = vmatpush2.msra.mxu0 0.0
      %127 = vmatprep.mubr.f32.mxu0 0.0
      %128 = vmatmul.mubr.f32.gmra.mxu0 %v61
      %v129 = vpop.f32.mrf.mxu0
      %v130 = vadd.f32 %v57, %v129
      %v131 = vpop.f32.mrf.mxu0
      %132 = vdwg.mxu0
      %v133 = vld [vmem:[%s5] sm:$0x1]
      %v135 = vlaneseq
      %v136 = vshrl.u32 %v135, 7
      %v137 = vsub.s32 0, %v136
      %v138 = vrot.slane %v133, %v137
      %v140 = vsub.f32 %v130, %v138
      %v141 = vld [vmem:[%s6] sm:$0x1]
      %v142 = vadd.f32 %v141, 1e-05
      %v143 = vrsqrt.pop %v142
      %v145 = vlaneseq
      %v146 = vshrl.u32 %v145, 7
      %v147 = vsub.s32 0, %v146
      %v148 = vrot.slane %v143, %v147
      %v150 = vmul.f32 %v140, %v148
      %v151 = vld [vmem:[%s3] sm:$0x1]
      %v153 = vlaneseq
      %v154 = vshrl.u32 %v153, 7
      %v155 = vsub.s32 0, %v154
      %v156 = vrot.slane %v151, %v155
      %v158 = vmul.f32 %v150, %v156
      %v159 = vld [vmem:[%s4] sm:$0x1]
      %v161 = vlaneseq
      %v162 = vshrl.u32 %v161, 7
      %v163 = vsub.s32 0, %v162
      %v164 = vrot.slane %v159, %v163
      %v166 = vadd.f32 %v158, %v164
      %v167 = vmul.f32 %v166, 0.5
      %v168 = vmul.f32 %v166, 0.70710677
      %v169 = verf.f32.pop %v168
      %v170 = vadd.f32 %v169, 1.0
      %v171 = vmul.f32 %v167, %v170
      %v172 = vmul.f32 %v171, %v171
      %vm173 = vcmask 254976
      %v174 = vsel %vm173, %v172, 0.0
      %175 = vadd.xlane.f32.xlu0 %v174
      %v176 = vpop.xlane.xlu0 %175
      %v177 = vrsqrt.pop %v176
      %v178 = vmul.f32 %v176, %v177
      %vm179 = vcmp.eq.f32.partialorder %v176, inf
      %v180 = vsel %vm179, %v176, %v178
      %vm181 = vcmp.eq.f32.partialorder %v176, 0.0
      %v182 = vand.u32 %v176, 2147483648
      %v183 = vsel %vm181, %v182, %v180
      %v184 = vmax.f32 %v183, 1e-06
      %v185 = vrcp.pop %v184
      %v186 = vmul.f32 %v171, %v185
      %187 = vst.msk [vmem:[#allocation2] sm:$0x3] %vm173, %v186
      %vm188 = vcmask 1041408
      %v189 = vsel %vm188, %v184, 0.0
      %v190 = vrot.slane %v189, 4
      %v191 = vadd.f32 %v189, %v190
      %v192 = vrot.slane %v191, 2
      %v193 = vadd.f32 %v191, %v192
      %v194 = vrot.slane %v193, 1
      %v195 = vadd.f32 %v193, %v194
      %v196 = vrcp.pop 2.0
      %v197 = vmul.f32 %v195, %v196
      %v198 = vsub.f32 %v184, %v197
      %v199 = vmul.f32 %v198, %v198
      %v200 = vsel %vm188, %v199, 0.0
      %v201 = vrot.slane %v200, 4
      %v202 = vadd.f32 %v200, %v201
      %v203 = vrot.slane %v202, 2
      %v204 = vadd.f32 %v202, %v203
      %v205 = vrot.slane %v204, 1
      %v206 = vadd.f32 %v204, %v205
      %v207 = vrsqrt.pop %v206
      %v208 = vmul.f32 %v206, %v207
      %vm209 = vcmp.eq.f32.partialorder %v206, inf
      %v210 = vsel %vm209, %v206, %v208
      %vm211 = vcmp.eq.f32.partialorder %v206, 0.0
      %v212 = vand.u32 %v206, 2147483648
      %v213 = vsel %vm211, %v212, %v210
      %v214 = vld [vmem:[%s7] sm:$0x1]
      %v215 = vmul.f32 %v214, 0.99
      %v216 = vmul.f32 %v197, 0.01
      %v217 = vadd.f32 %v215, %v216
      %v218 = vmul.f32 %v213, 0.01
      %v219 = vadd.f32 %v215, %v218
      %vm220 = vcmask 0
      %221 = vst.msk [vmem:[#allocation6] sm:$0x1] %vm220, %v217
      %vm222 = vcmask 8200
      %223 = vst.msk [vmem:[#allocation6] sm:$0x1] %vm222, %v219
      %v225 = vlaneseq
      %v226 = vshrl.u32 %v225, 7
      %v227 = vsub.s32 0, %v226
      %v228 = vrot.slane %v217, %v227
      %v230 = vsub.f32 %v184, %v228
      %v231 = vmul.f32 %v230, 0.5
      %v232 = vadd.f32 %v219, 1e-06
      %v234 = vlaneseq
      %v235 = vshrl.u32 %v234, 7
      %v236 = vsub.s32 0, %v235
      %v237 = vrot.slane %v232, %v236
      %238 = vrot.lane.b32.xlu0 %v237, 127
      %v239 = vpop.permute.xlu0 %238
      %v241 = vrcp.pop %v239
      %v242 = vmul.f32 %v231, %v241
      %v243 = vadd.f32 %v242, 0.7
      %vm244 = vcmask 1024
      %245 = vst.msk [vmem:[#allocation3] sm:$0x3] %vm244, %v243
    $region45: #{base_model_forward.3} parent=1 // pred_fallthru
      _
    %v246 = vld [vmem:[%s9] sm:$0xff]
    %v247 = vld [vmem:[%s9 + $0x8] sm:$0xff]
    %v248 = vld [vmem:[%s9 + $0x10] sm:$0xff]
    %v249 = vld [vmem:[%s9 + $0x18] sm:$0xff]
    %v250 = vld [vmem:[%s9 + $0x20] sm:$0xff]
    %v251 = vld [vmem:[%s9 + $0x28] sm:$0xff]
    %v252 = vld [vmem:[%s9 + $0x30] sm:$0xff]
    %v253 = vld [vmem:[%s9 + $0x38] sm:$0xff]
    %v254 = vld [vmem:[%s9 + $0x40] sm:$0xff]
    %v255 = vld [vmem:[%s9 + $0x48] sm:$0xff]
    %v256 = vld [vmem:[%s9 + $0x50] sm:$0xff]
    %v257 = vld [vmem:[%s9 + $0x58] sm:$0xff]
    %v258 = vld [vmem:[%s9 + $0x60] sm:$0xff]
    %v259 = vld [vmem:[%s9 + $0x68] sm:$0xff]
    %v260 = vld [vmem:[%s9 + $0x70] sm:$0xff]
    %v261 = vld [vmem:[%s9 + $0x78] sm:$0xff]
    %v262 = vmul.f32 %v246, %v246
    %v263 = vmul.f32 %v247, %v247
    %v264 = vmul.f32 %v248, %v248
    %v265 = vmul.f32 %v249, %v249
    %v266 = vmul.f32 %v250, %v250
    %v267 = vmul.f32 %v251, %v251
    %v268 = vmul.f32 %v252, %v252
    %v269 = vmul.f32 %v253, %v253
    %v270 = vmul.f32 %v254, %v254
    %v271 = vmul.f32 %v255, %v255
    %v272 = vmul.f32 %v256, %v256
    %v273 = vmul.f32 %v257, %v257
    %v274 = vmul.f32 %v258, %v258
    %v275 = vmul.f32 %v259, %v259
    %v276 = vmul.f32 %v260, %v260
    %v277 = vmul.f32 %v261, %v261
    %vm278 = vcmask 261120
    %v279 = vsel %vm278, %v262, 0.0
    %280 = vadd.xlane.f32.xlu0 %v279
    %v281 = vpop.xlane.xlu0 %280
    %v282 = vsel %vm278, %v263, 0.0
    %283 = vadd.xlane.f32.xlu0 %v282
    %v284 = vpop.xlane.xlu0 %283
    %v285 = vsel %vm278, %v264, 0.0
    %286 = vadd.xlane.f32.xlu0 %v285
    %v287 = vpop.xlane.xlu0 %286
    %v288 = vsel %vm278, %v265, 0.0
    %289 = vadd.xlane.f32.xlu0 %v288
    %v290 = vpop.xlane.xlu0 %289
    %v291 = vsel %vm278, %v266, 0.0
    %292 = vadd.xlane.f32.xlu0 %v291
    %v293 = vpop.xlane.xlu0 %292
    %v294 = vsel %vm278, %v267, 0.0
    %295 = vadd.xlane.f32.xlu0 %v294
    %v296 = vpop.xlane.xlu0 %295
    %v297 = vsel %vm278, %v268, 0.0
    %298 = vadd.xlane.f32.xlu0 %v297
    %v299 = vpop.xlane.xlu0 %298
    %v300 = vsel %vm278, %v269, 0.0
    %301 = vadd.xlane.f32.xlu0 %v300
    %v302 = vpop.xlane.xlu0 %301
    %v303 = vsel %vm278, %v270, 0.0
    %304 = vadd.xlane.f32.xlu0 %v303
    %v305 = vpop.xlane.xlu0 %304
    %v306 = vsel %vm278, %v271, 0.0
    %307 = vadd.xlane.f32.xlu0 %v306
    %v308 = vpop.xlane.xlu0 %307
    %v309 = vsel %vm278, %v272, 0.0
    %310 = vadd.xlane.f32.xlu0 %v309
    %v311 = vpop.xlane.xlu0 %310
    %v312 = vsel %vm278, %v273, 0.0
    %313 = vadd.xlane.f32.xlu0 %v312
    %v314 = vpop.xlane.xlu0 %313
    %v315 = vsel %vm278, %v274, 0.0
    %316 = vadd.xlane.f32.xlu0 %v315
    %v317 = vpop.xlane.xlu0 %316
    %v318 = vsel %vm278, %v275, 0.0
    %319 = vadd.xlane.f32.xlu0 %v318
    %v320 = vpop.xlane.xlu0 %319
    %v321 = vsel %vm278, %v276, 0.0
    %322 = vadd.xlane.f32.xlu0 %v321
    %v323 = vpop.xlane.xlu0 %322
    %v324 = vsel %vm278, %v277, 0.0
    %325 = vadd.xlane.f32.xlu0 %v324
    %v326 = vpop.xlane.xlu0 %325
    %v327 = vmax.f32 %v281, 1e-24
    %v328 = vmax.f32 %v284, 1e-24
    %v329 = vmax.f32 %v287, 1e-24
    %v330 = vmax.f32 %v290, 1e-24
    %v331 = vmax.f32 %v293, 1e-24
    %v332 = vmax.f32 %v296, 1e-24
    %v333 = vmax.f32 %v299, 1e-24
    %v334 = vmax.f32 %v302, 1e-24
    %v335 = vmax.f32 %v305, 1e-24
    %v336 = vmax.f32 %v308, 1e-24
    %v337 = vmax.f32 %v311, 1e-24
    %v338 = vmax.f32 %v314, 1e-24
    %v339 = vmax.f32 %v317, 1e-24
    %v340 = vmax.f32 %v320, 1e-24
    %v341 = vmax.f32 %v323, 1e-24
    %v342 = vmax.f32 %v326, 1e-24
    %v343 = vrsqrt.pop %v327
    %v344 = vrsqrt.pop %v328
    %v345 = vrsqrt.pop %v329
    %v346 = vrsqrt.pop %v330
    %v347 = vrsqrt.pop %v331
    %v348 = vrsqrt.pop %v332
    %v349 = vrsqrt.pop %v333
    %v350 = vrsqrt.pop %v334
    %v351 = vrsqrt.pop %v335
    %v352 = vrsqrt.pop %v336
    %v353 = vrsqrt.pop %v337
    %v354 = vrsqrt.pop %v338
    %v355 = vrsqrt.pop %v339
    %v356 = vrsqrt.pop %v340
    %v357 = vrsqrt.pop %v341
    %v358 = vrsqrt.pop %v342
    %v359 = vld [vmem:[#allocation2] sm:$0x3]
    %v360 = vmul.f32 %v246, %v343
    %v361 = vmul.f32 %v247, %v344
    %v362 = vmul.f32 %v248, %v345
    %v363 = vmul.f32 %v249, %v346
    %v364 = vmul.f32 %v250, %v347
    %v365 = vmul.f32 %v251, %v348
    %v366 = vmul.f32 %v252, %v349
    %v367 = vmul.f32 %v253, %v350
    %v368 = vmul.f32 %v254, %v351
    %v369 = vmul.f32 %v255, %v352
    %v370 = vmul.f32 %v256, %v353
    %v371 = vmul.f32 %v257, %v354
    %v372 = vmul.f32 %v258, %v355
    %v373 = vmul.f32 %v259, %v356
    %v374 = vmul.f32 %v260, %v357
    %v375 = vmul.f32 %v261, %v358
    %v377 = vsel %vm278, %v359, 0
    %v380 = vsel %vm278, %v360, 0
    %v383 = vsel %vm278, %v361, 0
    %v386 = vsel %vm278, %v362, 0
    %v389 = vsel %vm278, %v363, 0
    %v392 = vsel %vm278, %v364, 0
    %v395 = vsel %vm278, %v365, 0
    %v398 = vsel %vm278, %v366, 0
    %v401 = vsel %vm278, %v367, 0
    %v404 = vsel %vm278, %v368, 0
    %v407 = vsel %vm278, %v369, 0
    %v410 = vsel %vm278, %v370, 0
    %v413 = vsel %vm278, %v371, 0
    %v416 = vsel %vm278, %v372, 0
    %v419 = vsel %vm278, %v373, 0
    %v422 = vsel %vm278, %v374, 0
    %v425 = vsel %vm278, %v375, 0
    %427 = vmatprep.subr.mxu0 0.0
    %428 = vmatpush1.xpose.msra.mxu0 %v425
    %429 = vmatprep.subr.mxu0 0.0
    %430 = vmatpush1.xpose.msra.mxu0 %v422
    %431 = vmatprep.subr.mxu0 0.0
    %432 = vmatpush1.xpose.msra.mxu0 %v419
    %433 = vmatprep.subr.mxu0 0.0
    %434 = vmatpush1.xpose.msra.mxu0 %v416
    %435 = vmatprep.subr.mxu0 0.0
    %436 = vmatpush1.xpose.msra.mxu0 %v413
    %437 = vmatprep.subr.mxu0 0.0
    %438 = vmatpush1.xpose.msra.mxu0 %v410
    %439 = vmatprep.subr.mxu0 0.0
    %440 = vmatpush1.xpose.msra.mxu0 %v407
    %441 = vmatprep.subr.mxu0 0.0
    %442 = vmatpush1.xpose.msra.mxu0 %v404
    %443 = vmatprep.subr.mxu0 0.0
    %444 = vmatpush1.xpose.msra.mxu0 %v401
    %445 = vmatprep.subr.mxu0 0.0
    %446 = vmatpush1.xpose.msra.mxu0 %v398
    %447 = vmatprep.subr.mxu0 0.0
    %448 = vmatpush1.xpose.msra.mxu0 %v395
    %449 = vmatprep.subr.mxu0 0.0
    %450 = vmatpush1.xpose.msra.mxu0 %v392
    %451 = vmatprep.subr.mxu0 0.0
    %452 = vmatpush1.xpose.msra.mxu0 %v389
    %453 = vmatprep.subr.mxu0 0.0
    %454 = vmatpush1.xpose.msra.mxu0 %v386
    %455 = vmatprep.subr.mxu0 0.0
    %456 = vmatpush1.xpose.msra.mxu0 %v383
    %457 = vmatprep.subr.mxu0 0.0
    %458 = vmatpush1.xpose.msra.mxu0 %v380
    %459 = vmatprep.subr.mxu0 0.0
    %460 = vmatpush2.xpose.msra.mxu0 0.0
    %461 = vmatprep.subr.mxu0 0.0
    %462 = vmatpush2.xpose.msra.mxu0 0.0
    %463 = vmatprep.subr.mxu0 0.0
    %464 = vmatpush2.xpose.msra.mxu0 0.0
    %465 = vmatprep.subr.mxu0 0.0
    %466 = vmatpush2.xpose.msra.mxu0 0.0
    %467 = vmatprep.subr.mxu0 0.0
    %468 = vmatpush2.xpose.msra.mxu0 0.0
    %469 = vmatprep.subr.mxu0 0.0
    %470 = vmatpush2.xpose.msra.mxu0 0.0
    %471 = vmatprep.subr.mxu0 0.0
    %472 = vmatpush2.xpose.msra.mxu0 0.0
    %473 = vmatprep.subr.mxu0 0.0
    %474 = vmatpush2.xpose.msra.mxu0 0.0
    %475 = vmatprep.subr.mxu0 0.0
    %476 = vmatpush2.xpose.msra.mxu0 0.0
    %477 = vmatprep.subr.mxu0 0.0
    %478 = vmatpush2.xpose.msra.mxu0 0.0
    %479 = vmatprep.subr.mxu0 0.0
    %480 = vmatpush2.xpose.msra.mxu0 0.0
    %481 = vmatprep.subr.mxu0 0.0
    %482 = vmatpush2.xpose.msra.mxu0 0.0
    %483 = vmatprep.subr.mxu0 0.0
    %484 = vmatpush2.xpose.msra.mxu0 0.0
    %485 = vmatprep.subr.mxu0 0.0
    %486 = vmatpush2.xpose.msra.mxu0 0.0
    %487 = vmatprep.subr.mxu0 0.0
    %488 = vmatpush2.xpose.msra.mxu0 0.0
    %489 = vmatprep.subr.mxu0 0.0
    %490 = vmatpush2.xpose.msra.mxu0 0.0
    %491 = vmatprep.mubr.f32.mxu0 0.0
    %492 = vmatmul.mubr.f32.gmra.mxu0 %v377
    %v493 = vpop.f32.mrf.mxu0
    %v494 = vadd.f32 0.0, %v493
    %v495 = vpop.f32.mrf.mxu0
    %496 = vdwg.mxu0
    %v497 = vmax.f32 %v494, -0.999999
    %v498 = vmin.f32 %v497, 0.999999
    %v499 = vlaneseq
    %v500 = vand.u32 %v499, 127
    %s501 = smul.u32 0, 128
    %v502 = vstv %s501
    %v503 = vadd.s32 %v500, %v502
    %v504 = vld [vmem:[%s8] sm:$0x3]
    %505 = vset.pattern.permute.xlu0 0
    %506 = vperm.xlu0 %505, %v504
    %v507 = vpop.permute.xlu0 %506
    %vm508 = vcmp.eq.s32.totalorder %v503, %v507
    %v509 = vsel %vm508, 1, 0
    %v510 = vcvt.s32.f32 %v509
    %v511 = vld [vmem:[#allocation3] sm:$0x3]
    %v512 = vmul.f32 %v498, %v498
    %v513 = vsub.f32 1.0, %v512
    %v514 = vmax.f32 %v513, 0.0
    %v515 = vrsqrt.pop %v514
    %v516 = vmul.f32 %v514, %v515
    %vm517 = vcmp.eq.f32.partialorder %v514, inf
    %v518 = vsel %vm517, %v514, %v516
    %vm519 = vcmp.eq.f32.partialorder %v514, 0.0
    %v520 = vand.u32 %v514, 2147483648
    %v521 = vsel %vm519, %v520, %v518
    %v522 = vand.u32 2147483647, %v511
    %vm523 = vcmp.le.f32.partialorder %v522, 0.7853982
    %vm524 = vcmp.lt.s32.totalorder %v511, 0
    %v525 = vand.u32 %v511, 2139095040
    %v526 = vshrl.u32 %v525, 23
    %v527 = vsub.s32 %v526, 127
    %v528 = vand.u32 2147483647, %v511
    %v529 = vand.u32 %v528, 8388607
    %v530 = vor.u32 %v529, 8388608
    %v531 = vsub.s32 0, %v530
    %v532 = vadd.s32 %v527, 1
    %vm533 = vcmp.gt.s32.totalorder %v532, 0
    %v534 = vsel %vm533, %v532, 0
    %v535 = vshrl.u32 %v534, 5
    %v536 = vand.u32 %v534, 31
    %v537 = vsub.s32 32, %v536
    %v538 = vshrl.u32 683565275, %v537
    %v539 = vshll.u32 683565275, %v536
    %v540 = vshrl.u32 2475754826, %v537
    %v541 = vor.u32 %v539, %v540
    %v542 = vshll.u32 2475754826, %v536
    %v543 = vshrl.u32 2131351028, %v537
    %v544 = vor.u32 %v542, %v543
    %v545 = vshll.u32 2131351028, %v536
    %v546 = vshrl.u32 2102212464, %v537
    %v547 = vor.u32 %v545, %v546
    %v548 = vshll.u32 2102212464, %v536
    %v549 = vshrl.u32 920167782, %v537
    %v550 = vor.u32 %v548, %v549
    %v551 = vshll.u32 920167782, %v536
    %v552 = vshrl.u32 1326507024, %v537
    %v553 = vor.u32 %v551, %v552
    %vm554 = vcmp.lt.s32.totalorder %v535, 1
    %vm555 = vcmp.lt.s32.totalorder %v535, 2
    %vm556 = vcmp.lt.s32.totalorder %v535, 3
    %vm557 = vcmp.lt.s32.totalorder %v535, 4
    %v558 = vsel %vm554, %v538, %v541
    %v559 = vsel %vm557, %v547, 2102212464
    %v560 = vsel %vm556, %v544, %v559
    %v561 = vsel %vm555, %v558, %v560
    %v562 = vsel %vm554, %v541, %v544
    %v563 = vsel %vm557, %v550, 920167782
    %v564 = vsel %vm556, %v547, %v563
    %v565 = vsel %vm555, %v562, %v564
    %v566 = vsel %vm554, %v544, %v547
    %v567 = vsel %vm557, %v553, 1326507024
    %v568 = vsel %vm556, %v550, %v567
    %v569 = vsel %vm555, %v566, %v568
    %v570 = vshll.u32 %v530, 8
    %v571 = vmul.u32.u64.compose %v570, %v569
    %v572 = vextract.low.u32 %v571
    %v573 = vextract.high.u32 %v571
    %v574 = vmul.u32.u64.compose %v570, %v565
    %v575 = vextract.low.u32 %v574
    %v576 = vextract.high.u32 %v574
    %v577 = vmul.u32 %v570, %v561
    %v578 = vadd.s32 %v573, %v575
    %vm579 = vc.u32 %v573, %v575
    %v580 = vadd.s32 %v576, 1
    %v581 = vsel %vm579, %v580, %v576
    %v582 = vadd.s32 %v577, %v581
    %v583 = vadd.s32 %v582, 536870912
    %v584 = vshrl.u32 %v583, 30
    %v585 = vshll.u32 %v584, 30
    %v586 = vsub.s32 %v582, %v585
    %vm587 = vcmp.lt.s32.totalorder %v586, 0
    %v588 = vsub.s32 0, %v586
    %v589 = vsel %vm587, %v588, %v586
    %v590 = vclz %v589
    %v591 = vsub.s32 %v590, 2
    %vm592 = vcmp.gt.s32.totalorder 0, %v591
    %v593 = vsel %vm592, 0, %v591
    %v594 = vsub.s32 32, %v593
    %v595 = vshll.u32 %v586, %v593
    %v596 = vshrl.u32 %v578, %v594
    %v597 = vor.u32 %v595, %v596
    %v598 = vsub.s32 4294967266, %v593
    %v599 = vadd.s32 %v598, 127
    %v600 = vshll.u32 %v599, 23
    %v601 = vor.u32 4788187, %v600
    %v602 = vand.u32 2147483647, %v601
    %v604 = vcvt.s32.f32 %v597
    %v605 = vmul.f32 %v604, %v602
    %v606 = vxor.u32 %v605, 2147483648
    %v607 = vsel %vm524, %v606, %v605
    %v608 = vsub.s32 4, %v584
    %v609 = vsel %vm524, %v608, %v584
    %v610 = vsel %vm523, %v511, %v607
    %v611 = vsel %vm523, 0, %v609
    %v612 = vcosq.f32.pop %v610
    %v613 = vsinq.f32.pop %v610
    %vm614 = vweird.f32 %v511
    %v615 = vand.u32 %v611, 3
    %vm616 = vcmp.lt.s32.totalorder %v615, 2
    %vm617 = vcmp.eq.s32.totalorder %v615, 0
    %v618 = vxor.u32 %v613, 2147483648
    %v619 = vsel %vm617, %v612, %v618
    %vm620 = vcmp.eq.s32.totalorder %v615, 2
    %v621 = vxor.u32 %v612, 2147483648
    %v622 = vsel %vm620, %v621, %v613
    %v623 = vsel %vm616, %v619, %v622
    %v624 = vsel %vm614, nan, %v623
    %626 = vset.pattern.permute.xlu0 0
    %627 = vperm.xlu0 %626, %v624
    %v628 = vpop.permute.xlu0 %627
    %v630 = vmul.f32 %v498, %v628
    %v631 = vand.u32 2147483647, %v511
    %vm632 = vcmp.le.f32.partialorder %v631, 0.7853982
    %vm633 = vcmp.lt.s32.totalorder %v511, 0
    %v634 = vand.u32 %v511, 2139095040
    %v635 = vshrl.u32 %v634, 23
    %v636 = vsub.s32 %v635, 127
    %v637 = vand.u32 2147483647, %v511
    %v638 = vand.u32 %v637, 8388607
    %v639 = vor.u32 %v638, 8388608
    %v640 = vsub.s32 0, %v639
    %v641 = vadd.s32 %v636, 1
    %vm642 = vcmp.gt.s32.totalorder %v641, 0
    %v643 = vsel %vm642, %v641, 0
    %v644 = vshrl.u32 %v643, 5
    %v645 = vand.u32 %v643, 31
    %v646 = vsub.s32 32, %v645
    %v647 = vshrl.u32 683565275, %v646
    %v648 = vshll.u32 683565275, %v645
    %v649 = vshrl.u32 2475754826, %v646
    %v650 = vor.u32 %v648, %v649
    %v651 = vshll.u32 2475754826, %v645
    %v652 = vshrl.u32 2131351028, %v646
    %v653 = vor.u32 %v651, %v652
    %v654 = vshll.u32 2131351028, %v645
    %v655 = vshrl.u32 2102212464, %v646
    %v656 = vor.u32 %v654, %v655
    %v657 = vshll.u32 2102212464, %v645
    %v658 = vshrl.u32 920167782, %v646
    %v659 = vor.u32 %v657, %v658
    %v660 = vshll.u32 920167782, %v645
    %v661 = vshrl.u32 1326507024, %v646
    %v662 = vor.u32 %v660, %v661
    %vm663 = vcmp.lt.s32.totalorder %v644, 1
    %vm664 = vcmp.lt.s32.totalorder %v644, 2
    %vm665 = vcmp.lt.s32.totalorder %v644, 3
    %vm666 = vcmp.lt.s32.totalorder %v644, 4
    %v667 = vsel %vm663, %v647, %v650
    %v668 = vsel %vm666, %v656, 2102212464
    %v669 = vsel %vm665, %v653, %v668
    %v670 = vsel %vm664, %v667, %v669
    %v671 = vsel %vm663, %v650, %v653
    %v672 = vsel %vm666, %v659, 920167782
    %v673 = vsel %vm665, %v656, %v672
    %v674 = vsel %vm664, %v671, %v673
    %v675 = vsel %vm663, %v653, %v656
    %v676 = vsel %vm666, %v662, 1326507024
    %v677 = vsel %vm665, %v659, %v676
    %v678 = vsel %vm664, %v675, %v677
    %v679 = vshll.u32 %v639, 8
    %v680 = vmul.u32.u64.compose %v679, %v678
    %v681 = vextract.low.u32 %v680
    %v682 = vextract.high.u32 %v680
    %v683 = vmul.u32.u64.compose %v679, %v674
    %v684 = vextract.low.u32 %v683
    %v685 = vextract.high.u32 %v683
    %v686 = vmul.u32 %v679, %v670
    %v687 = vadd.s32 %v682, %v684
    %vm688 = vc.u32 %v682, %v684
    %v689 = vadd.s32 %v685, 1
    %v690 = vsel %vm688, %v689, %v685
    %v691 = vadd.s32 %v686, %v690
    %v692 = vadd.s32 %v691, 536870912
    %v693 = vshrl.u32 %v692, 30
    %v694 = vshll.u32 %v693, 30
    %v695 = vsub.s32 %v691, %v694
    %vm696 = vcmp.lt.s32.totalorder %v695, 0
    %v697 = vsub.s32 0, %v695
    %v698 = vsel %vm696, %v697, %v695
    %v699 = vclz %v698
    %v700 = vsub.s32 %v699, 2
    %vm701 = vcmp.gt.s32.totalorder 0, %v700
    %v702 = vsel %vm701, 0, %v700
    %v703 = vsub.s32 32, %v702
    %v704 = vshll.u32 %v695, %v702
    %v705 = vshrl.u32 %v687, %v703
    %v706 = vor.u32 %v704, %v705
    %v707 = vsub.s32 4294967266, %v702
    %v708 = vadd.s32 %v707, 127
    %v709 = vshll.u32 %v708, 23
    %v710 = vor.u32 4788187, %v709
    %v711 = vand.u32 2147483647, %v710
    %v713 = vcvt.s32.f32 %v706
    %v714 = vmul.f32 %v713, %v711
    %v715 = vxor.u32 %v714, 2147483648
    %v716 = vsel %vm633, %v715, %v714
    %v717 = vsub.s32 4, %v693
    %v718 = vsel %vm633, %v717, %v693
    %v719 = vsel %vm632, %v511, %v716
    %v720 = vsel %vm632, 0, %v718
    %v721 = vcosq.f32.pop %v719
    %v722 = vsinq.f32.pop %v719
    %vm723 = vweird.f32 %v511
    %v724 = vadd.s32 %v720, 3
    %v725 = vand.u32 %v724, 3
    %vm726 = vcmp.lt.s32.totalorder %v725, 2
    %vm727 = vcmp.eq.s32.totalorder %v725, 0
    %v728 = vxor.u32 %v722, 2147483648
    %v729 = vsel %vm727, %v721, %v728
    %vm730 = vcmp.eq.s32.totalorder %v725, 2
    %v731 = vxor.u32 %v721, 2147483648
    %v732 = vsel %vm730, %v731, %v722
    %v733 = vsel %vm726, %v729, %v732
    %v734 = vsel %vm723, nan, %v733
    %736 = vset.pattern.permute.xlu0 0
    %737 = vperm.xlu0 %736, %v734
    %v738 = vpop.permute.xlu0 %737
    %v740 = vmul.f32 %v521, %v738
    %v741 = vsub.f32 %v630, %v740
    %v742 = vsub.f32 1.0, %v510
    %v743 = vmul.f32 %v498, %v742
    %v744 = vmul.f32 %v741, %v510
    %v745 = vadd.f32 %v743, %v744
    %v746 = vmul.f32 %v745, 30.0
    %747 = vst [vmem:[#allocation4] sm:$0x3] %v746
    // Predicated region
    $region46: #{base_model_forward.3} parent=1 // pred_check
      _
    $region47: #{base_model_forward.3} parent=1 // pred_check_branch
      %749 = sbr.rel (0) target = $region49
    $region48: #{base_model_forward.3} parent=1 // pred_region
      %s751 = ssub.s32 32, 32
      %752 = vsyncadd [#allocation5], %s751
      %s754 = sshll.u32 [#allocation4], 4
      %s755 = int_to_ptr.vmem [resolvable:$true] %s754
      %757 = dma.vmem_to_hbm [thread:$0]  %s755, 32, %s10, [#allocation5]
    $region49: #{base_model_forward.3} parent=1 // pred_fallthru
      _
    // Predicated region
    $region50: #{base_model_forward.3} parent=1 // pred_check
      _
    $region51: #{base_model_forward.3} parent=1 // pred_check_branch
      %759 = sbr.rel (0) target = $region53
    $region52: #{base_model_forward.3} parent=1 // pred_region
      %s761 = ssub.s32 16, 16
      %762 = vsyncadd [#allocation7], %s761
      %s764 = sshll.u32 [#allocation6], 4
      %s765 = int_to_ptr.vmem [resolvable:$true] %s764
      %767 = dma.vmem_to_hbm [thread:$0]  %s765, 16, %s11, [#allocation7]
    $region53: #{base_model_forward.3} parent=1 // pred_fallthru
      _
    // Predicated region
    $region54: #{base_model_forward.3} parent=1 // pred_check
      _
    $region55: #{base_model_forward.3} parent=1 // pred_check_branch
      %769 = sbr.rel (0) target = $region57
    $region56: #{base_model_forward.3} parent=1 // pred_region
      %770 = dma.done [#allocation5], 32
    $region57: #{base_model_forward.3} parent=1 // pred_fallthru
      _
    // Predicated region
    $region58: #{base_model_forward.3} parent=1 // pred_check
      _
    $region59: #{base_model_forward.3} parent=1 // pred_check_branch
      %772 = sbr.rel (0) target = $region61
    $region60: #{base_model_forward.3} parent=1 // pred_region
      %773 = dma.done [#allocation7], 16
    $region61: #{base_model_forward.3} parent=1 // pred_fallthru
      _
    %774 = vsyncpa [#allocation5], 1
    %775 = vsyncpa [#allocation7], 1

</llo_original>
